<compile_context>
chip_gen: v7x
topology: tpu7x:2x2x1
jax: 0.10.0
libtpu: 0.0.40
codegen_flags: <defaults>
</compile_context>

<pallas_src>
import functools
import math

import jax
import jax.numpy as jnp
from jax import lax
from jax.experimental import pallas as pl
from jax.experimental.pallas import tpu as pltpu


_LANE = 512        # lane-dense last dim (multiple of 128 -> unmasked stores)
_TILE_ROWS = 256   # 256x512 f32 tile ~0.5 MiB; sized for v7x VMEM headroom


def _round_up(a, b):
    return (a + b - 1) // b * b


def _as_i32(v):
    """uint32 literal -> equivalent signed int32 Python int."""
    v &= 0xFFFFFFFF
    return v - (1 << 32) if v >= (1 << 31) else v


def _shr(s, k):
    """Logical right shift on int32 (arithmetic shift, then mask sign bits)."""
    return (s >> k) & jnp.int32((1 << (32 - k)) - 1)


def _fmix32(s):
    """murmur3 finalizer on int32 (wrap-around multiplies) for good avalanche."""
    s = s ^ _shr(s, 16)
    s = s * jnp.int32(_as_i32(0x85EBCA6B))
    s = s ^ _shr(s, 13)
    s = s * jnp.int32(_as_i32(0xC2B2AE35))
    s = s ^ _shr(s, 16)
    return s


def _default_n_iters(lam):
    # rate = max(z*lam, 0) with z~N(0,1): rates beyond ~5*|lam| are vanishingly
    # rare, and the Poisson tail above r + 8*sqrt(r) + 2 is negligible, so the
    # Knuth cap scales with lam instead of being a fixed 24.
    r = 5.0 * abs(float(lam))
    return max(4, int(math.ceil(r + 8.0 * math.sqrt(r) + 2.0)))


def _poisson_noise_kernel(seed_ref, x_ref, rate_ref, o_ref, *, n_iters):
    """o = x + Poisson(max(rate, 0)) via a vectorized Knuth sampler."""
    tile_rows, lane = x_ref.shape

    # Counter-based PRNG state: globally-unique element id mixed with the seed.
    # Pure int32 ops -> lowers on Mosaic and in CPU interpret mode; distinct
    # stream per tile (program_id folded into the counter).
    ri = lax.broadcasted_iota(jnp.int32, (tile_rows, lane), 0)
    ci = lax.broadcasted_iota(jnp.int32, (tile_rows, lane), 1)
    gid = (pl.program_id(0) * tile_rows + ri) * lane + ci
    s = _fmix32(gid ^ seed_ref[0])          # per-element xorshift32 state

    # TODO(synk): torch.poisson rejects negative rates; we clamp them to 0.
    rate = jnp.maximum(rate_ref[...].astype(jnp.float32), jnp.float32(0.0))
    thresh = jnp.exp(-rate)                 # Knuth threshold L = exp(-rate)

    p = jnp.ones((tile_rows, lane), jnp.float32)
    cnt = jnp.zeros((tile_rows, lane), jnp.float32)
    one = jnp.float32(1.0)
    zero = jnp.float32(0.0)
    inv = jnp.float32(1.0 / 4294967296.0)
    half = jnp.float32(0.5)

    # Vectorized Knuth: count how long the running product of uniforms stays
    # above L.  Statically unrolled (n_iters is a trace-time constant) so the
    # scheduler can co-issue PRNG / multiply / compare across iterations.
    for _ in range(n_iters):
        s = s ^ (s << 13)                   # xorshift32 step
        s = s ^ _shr(s, 17)
        s = s ^ (s << 5)
        u = s.astype(jnp.float32) * inv + half   # uniform in [0, 1]
        p = p * u
        cnt = cnt + jnp.where(p > thresh, one, zero)

    # x is loaded only here so it is not live across the sampling loop.
    o_ref[...] = x_ref[...] + cnt.astype(o_ref.dtype)


def _add_poisson(x, rate, seed, *, n_iters):
    """x + Poisson(max(rate, 0)) elementwise via the Pallas kernel."""
    orig_shape = x.shape
    total = x.size

    rows = _round_up(max(int(pl.cdiv(total, _LANE)), 1), 8)
    tile_rows = min(_TILE_ROWS, rows)
    rows = _round_up(rows, tile_rows)
    pad = rows * _LANE - total

    x2 = jnp.pad(jnp.ravel(x), (0, pad)).reshape(rows, _LANE)
    r2 = jnp.pad(jnp.ravel(rate), (0, pad)).reshape(rows, _LANE)

    out2 = pl.pallas_call(
        functools.partial(_poisson_noise_kernel, n_iters=n_iters),
        out_shape=jax.ShapeDtypeStruct((rows, _LANE), x.dtype),
        grid=(rows // tile_rows,),
        in_specs=[
            pl.BlockSpec(memory_space=pltpu.MemorySpace.SMEM),    # seed scalar
            pl.BlockSpec((tile_rows, _LANE), lambda i: (i, 0)),   # x tile
            pl.BlockSpec((tile_rows, _LANE), lambda i: (i, 0)),   # rate tile
        ],
        out_specs=pl.BlockSpec((tile_rows, _LANE), lambda i: (i, 0)),
        compiler_params=pltpu.CompilerParams(
            dimension_semantics=("parallel",)),   # megacore split on v7x
    )(seed, x2, r2)

    return out2.reshape(-1)[:total].reshape(orig_shape)


def poisson_noise(x, key, *, lam, probability, n_iters=None):
    """JAX/Pallas equivalent of PoissonNoise.forward."""
    if n_iters is None:
        n_iters = _default_n_iters(lam)
    kg, kz, ks = jax.random.split(key, 3)
    seed = jax.random.randint(ks, (1,), 0, 2**31 - 1, dtype=jnp.int32)

    def noisy(xx):
        # torch.randn_like(x) * lam, drawn at full fidelity in the wrapper.
        z = jax.random.normal(kz, xx.shape, dtype=jnp.float32)
        return _add_poisson(xx, z * jnp.float32(lam), seed, n_iters=n_iters)

    # The identity path never pays the kernel's HBM round-trip.
    if probability <= 0.0:
        return x
    if probability >= 1.0:
        return noisy(x)
    gate = jax.random.uniform(kg, ()) < probability
    return lax.cond(gate, noisy, lambda xx: xx, x)


if __name__ == "__main__":
    key = jax.random.PRNGKey(0)
    kx, kcall = jax.random.split(key)

    # Small NCHW input consistent with the module's image-denoising use.
    x = jax.random.normal(kx, (2, 4, 16, 16), dtype=jnp.float32)
    lam = 0.5

    # probability = 1 -> noisy branch.
    y = poisson_noise(x, kcall, lam=lam, probability=1.0)
    y = jax.block_until_ready(y)
    assert y.shape == x.shape and y.dtype == x.dtype
    diff = y - x
    # Counts are non-negative integers; allow f32 rounding of (x + cnt) - x.
    assert bool(jnp.all(diff >= -1e-5))
    assert bool(jnp.all(jnp.abs(diff - jnp.round(diff)) < 1e-3))
    assert bool(jnp.any(diff > 0.5))                 # some noise was added
    m = float(jnp.mean(diff))
    assert 0.05 < m < 0.5, m                         # ~lam/sqrt(2*pi) ~= 0.2

    # probability = 0 -> identity, bypasses the kernel.
    y_id = poisson_noise(x, kcall, lam=lam, probability=0.0)
    jax.block_until_ready(y_id)
    assert bool(jnp.all(y_id == x))

    # 0 < probability < 1 -> runtime Bernoulli gate via lax.cond.
    y_p = poisson_noise(x, kcall, lam=lam, probability=0.5)
    y_p = jax.block_until_ready(y_p)
    d = y_p - x
    assert bool(jnp.all(d >= -1e-5))
    assert bool(jnp.all(jnp.abs(d - jnp.round(d)) < 1e-3))

    print("KERNEL_OK")
</pallas_src>

<mosaic_0001>
module attributes {stable_mosaic.version = 11 : i64} {
  func.func @_poisson_noise_kernel(%arg0: i32, %arg1: memref<1xi32, #tpu.memory_space<smem>>, %arg2: memref<8x512xf32, #tpu.memory_space<vmem>>, %arg3: memref<8x512xf32, #tpu.memory_space<vmem>>, %arg4: memref<8x512xf32, #tpu.memory_space<vmem>>) attributes {dimension_semantics = [#tpu.dimension_semantics<parallel>], iteration_bounds = array<i64: 1>, scalar_prefetch = 0 : i64, scratch_operands = 0 : i64, tpu.core_type = #tpu.core_type<tc>, window_params = [{transform_indices = @transform_0, window_bounds = array<i64: 1>}, {transform_indices = @transform_1, window_bounds = array<i64: 8, 512>}, {transform_indices = @transform_2, window_bounds = array<i64: 8, 512>}, {transform_indices = @transform_3, window_bounds = array<i64: 8, 512>}]} {
    %0 = tpu.iota {dimensions = array<i32: 0>} : vector<8x512xi32>
    %1 = tpu.iota {dimensions = array<i32: 1>} : vector<8x512xi32>
    %c8_i32 = arith.constant 8 : i32
    %2 = arith.muli %arg0, %c8_i32 : i32
    %3 = vector.broadcast %2 : i32 to vector<8x512xi32>
    %4 = arith.addi %3, %0 : vector<8x512xi32>
    %c512_i32 = arith.constant 512 : i32
    %5 = vector.broadcast %c512_i32 : i32 to vector<8x512xi32>
    %6 = arith.muli %4, %5 : vector<8x512xi32>
    %7 = arith.addi %6, %1 : vector<8x512xi32>
    %c0 = arith.constant 0 : index
    %8 = memref.load %arg1[%c0] : memref<1xi32, #tpu.memory_space<smem>>
    %9 = vector.broadcast %8 : i32 to vector<8x512xi32>
    %10 = arith.xori %7, %9 : vector<8x512xi32>
    %c16_i32 = arith.constant 16 : i32
    %11 = vector.broadcast %c16_i32 : i32 to vector<8x512xi32>
    %12 = arith.shrsi %10, %11 : vector<8x512xi32>
    %c65535_i32 = arith.constant 65535 : i32
    %13 = vector.broadcast %c65535_i32 : i32 to vector<8x512xi32>
    %14 = arith.andi %12, %13 : vector<8x512xi32>
    %15 = arith.xori %10, %14 : vector<8x512xi32>
    %c-2048144789_i32 = arith.constant -2048144789 : i32
    %16 = vector.broadcast %c-2048144789_i32 : i32 to vector<8x512xi32>
    %17 = arith.muli %15, %16 : vector<8x512xi32>
    %c13_i32 = arith.constant 13 : i32
    %18 = vector.broadcast %c13_i32 : i32 to vector<8x512xi32>
    %19 = arith.shrsi %17, %18 : vector<8x512xi32>
    %c524287_i32 = arith.constant 524287 : i32
    %20 = vector.broadcast %c524287_i32 : i32 to vector<8x512xi32>
    %21 = arith.andi %19, %20 : vector<8x512xi32>
    %22 = arith.xori %17, %21 : vector<8x512xi32>
    %c-1028477387_i32 = arith.constant -1028477387 : i32
    %23 = vector.broadcast %c-1028477387_i32 : i32 to vector<8x512xi32>
    %24 = arith.muli %22, %23 : vector<8x512xi32>
    %c16_i32_0 = arith.constant 16 : i32
    %25 = vector.broadcast %c16_i32_0 : i32 to vector<8x512xi32>
    %26 = arith.shrsi %24, %25 : vector<8x512xi32>
    %c65535_i32_1 = arith.constant 65535 : i32
    %27 = vector.broadcast %c65535_i32_1 : i32 to vector<8x512xi32>
    %28 = arith.andi %26, %27 : vector<8x512xi32>
    %29 = arith.xori %24, %28 : vector<8x512xi32>
    %c0_2 = arith.constant 0 : index
    %c0_3 = arith.constant 0 : index
    %30 = vector.load %arg3[%c0_2, %c0_3] : memref<8x512xf32, #tpu.memory_space<vmem>>, vector<8x512xf32>
    %cst = arith.constant 0.000000e+00 : f32
    %31 = vector.broadcast %cst : f32 to vector<8x512xf32>
    %32 = arith.maximumf %30, %31 : vector<8x512xf32>
    %cst_4 = arith.constant 0.000000e+00 : f32
    %33 = vector.broadcast %cst_4 : f32 to vector<8x512xf32>
    %34 = arith.subf %33, %32 : vector<8x512xf32>
    %35 = math.exp %34 : vector<8x512xf32>
    %cst_5 = arith.constant 1.000000e+00 : f32
    %36 = vector.broadcast %cst_5 : f32 to vector<8x512xf32>
    %cst_6 = arith.constant 0.000000e+00 : f32
    %37 = vector.broadcast %cst_6 : f32 to vector<8x512xf32>
    %c13_i32_7 = arith.constant 13 : i32
    %38 = vector.broadcast %c13_i32_7 : i32 to vector<8x512xi32>
    %39 = arith.shli %29, %38 : vector<8x512xi32>
    %40 = arith.xori %29, %39 : vector<8x512xi32>
    %c17_i32 = arith.constant 17 : i32
    %41 = vector.broadcast %c17_i32 : i32 to vector<8x512xi32>
    %42 = arith.shrsi %40, %41 : vector<8x512xi32>
    %c32767_i32 = arith.constant 32767 : i32
    %43 = vector.broadcast %c32767_i32 : i32 to vector<8x512xi32>
    %44 = arith.andi %42, %43 : vector<8x512xi32>
    %45 = arith.xori %40, %44 : vector<8x512xi32>
    %c5_i32 = arith.constant 5 : i32
    %46 = vector.broadcast %c5_i32 : i32 to vector<8x512xi32>
    %47 = arith.shli %45, %46 : vector<8x512xi32>
    %48 = arith.xori %45, %47 : vector<8x512xi32>
    %49 = arith.sitofp %48 : vector<8x512xi32> to vector<8x512xf32>
    %cst_8 = arith.constant 2.32830644E-10 : f32
    %50 = vector.broadcast %cst_8 : f32 to vector<8x512xf32>
    %51 = arith.mulf %49, %50 : vector<8x512xf32>
    %cst_9 = arith.constant 5.000000e-01 : f32
    %52 = vector.broadcast %cst_9 : f32 to vector<8x512xf32>
    %53 = arith.addf %51, %52 : vector<8x512xf32>
    %54 = arith.mulf %36, %53 : vector<8x512xf32>
    %55 = arith.cmpf ogt, %54, %35 : vector<8x512xf32>
    %cst_10 = arith.constant 1.000000e+00 : f32
    %cst_11 = arith.constant 0.000000e+00 : f32
    %56 = vector.broadcast %cst_10 : f32 to vector<8x512xf32>
    %57 = vector.broadcast %cst_11 : f32 to vector<8x512xf32>
    %58 = arith.select %55, %56, %57 : vector<8x512xi1>, vector<8x512xf32>
    %59 = arith.addf %37, %58 : vector<8x512xf32>
    %c13_i32_12 = arith.constant 13 : i32
    %60 = vector.broadcast %c13_i32_12 : i32 to vector<8x512xi32>
    %61 = arith.shli %48, %60 : vector<8x512xi32>
    %62 = arith.xori %48, %61 : vector<8x512xi32>
    %c17_i32_13 = arith.constant 17 : i32
    %63 = vector.broadcast %c17_i32_13 : i32 to vector<8x512xi32>
    %64 = arith.shrsi %62, %63 : vector<8x512xi32>
    %c32767_i32_14 = arith.constant 32767 : i32
    %65 = vector.broadcast %c32767_i32_14 : i32 to vector<8x512xi32>
    %66 = arith.andi %64, %65 : vector<8x512xi32>
    %67 = arith.xori %62, %66 : vector<8x512xi32>
    %c5_i32_15 = arith.constant 5 : i32
    %68 = vector.broadcast %c5_i32_15 : i32 to vector<8x512xi32>
    %69 = arith.shli %67, %68 : vector<8x512xi32>
    %70 = arith.xori %67, %69 : vector<8x512xi32>
    %71 = arith.sitofp %70 : vector<8x512xi32> to vector<8x512xf32>
    %cst_16 = arith.constant 2.32830644E-10 : f32
    %72 = vector.broadcast %cst_16 : f32 to vector<8x512xf32>
    %73 = arith.mulf %71, %72 : vector<8x512xf32>
    %cst_17 = arith.constant 5.000000e-01 : f32
    %74 = vector.broadcast %cst_17 : f32 to vector<8x512xf32>
    %75 = arith.addf %73, %74 : vector<8x512xf32>
    %76 = arith.mulf %54, %75 : vector<8x512xf32>
    %77 = arith.cmpf ogt, %76, %35 : vector<8x512xf32>
    %cst_18 = arith.constant 1.000000e+00 : f32
    %cst_19 = arith.constant 0.000000e+00 : f32
    %78 = vector.broadcast %cst_18 : f32 to vector<8x512xf32>
    %79 = vector.broadcast %cst_19 : f32 to vector<8x512xf32>
    %80 = arith.select %77, %78, %79 : vector<8x512xi1>, vector<8x512xf32>
    %81 = arith.addf %59, %80 : vector<8x512xf32>
    %c13_i32_20 = arith.constant 13 : i32
    %82 = vector.broadcast %c13_i32_20 : i32 to vector<8x512xi32>
    %83 = arith.shli %70, %82 : vector<8x512xi32>
    %84 = arith.xori %70, %83 : vector<8x512xi32>
    %c17_i32_21 = arith.constant 17 : i32
    %85 = vector.broadcast %c17_i32_21 : i32 to vector<8x512xi32>
    %86 = arith.shrsi %84, %85 : vector<8x512xi32>
    %c32767_i32_22 = arith.constant 32767 : i32
    %87 = vector.broadcast %c32767_i32_22 : i32 to vector<8x512xi32>
    %88 = arith.andi %86, %87 : vector<8x512xi32>
    %89 = arith.xori %84, %88 : vector<8x512xi32>
    %c5_i32_23 = arith.constant 5 : i32
    %90 = vector.broadcast %c5_i32_23 : i32 to vector<8x512xi32>
    %91 = arith.shli %89, %90 : vector<8x512xi32>
    %92 = arith.xori %89, %91 : vector<8x512xi32>
    %93 = arith.sitofp %92 : vector<8x512xi32> to vector<8x512xf32>
    %cst_24 = arith.constant 2.32830644E-10 : f32
    %94 = vector.broadcast %cst_24 : f32 to vector<8x512xf32>
    %95 = arith.mulf %93, %94 : vector<8x512xf32>
    %cst_25 = arith.constant 5.000000e-01 : f32
    %96 = vector.broadcast %cst_25 : f32 to vector<8x512xf32>
    %97 = arith.addf %95, %96 : vector<8x512xf32>
    %98 = arith.mulf %76, %97 : vector<8x512xf32>
    %99 = arith.cmpf ogt, %98, %35 : vector<8x512xf32>
    %cst_26 = arith.constant 1.000000e+00 : f32
    %cst_27 = arith.constant 0.000000e+00 : f32
    %100 = vector.broadcast %cst_26 : f32 to vector<8x512xf32>
    %101 = vector.broadcast %cst_27 : f32 to vector<8x512xf32>
    %102 = arith.select %99, %100, %101 : vector<8x512xi1>, vector<8x512xf32>
    %103 = arith.addf %81, %102 : vector<8x512xf32>
    %c13_i32_28 = arith.constant 13 : i32
    %104 = vector.broadcast %c13_i32_28 : i32 to vector<8x512xi32>
    %105 = arith.shli %92, %104 : vector<8x512xi32>
    %106 = arith.xori %92, %105 : vector<8x512xi32>
    %c17_i32_29 = arith.constant 17 : i32
    %107 = vector.broadcast %c17_i32_29 : i32 to vector<8x512xi32>
    %108 = arith.shrsi %106, %107 : vector<8x512xi32>
    %c32767_i32_30 = arith.constant 32767 : i32
    %109 = vector.broadcast %c32767_i32_30 : i32 to vector<8x512xi32>
    %110 = arith.andi %108, %109 : vector<8x512xi32>
    %111 = arith.xori %106, %110 : vector<8x512xi32>
    %c5_i32_31 = arith.constant 5 : i32
    %112 = vector.broadcast %c5_i32_31 : i32 to vector<8x512xi32>
    %113 = arith.shli %111, %112 : vector<8x512xi32>
    %114 = arith.xori %111, %113 : vector<8x512xi32>
    %115 = arith.sitofp %114 : vector<8x512xi32> to vector<8x512xf32>
    %cst_32 = arith.constant 2.32830644E-10 : f32
    %116 = vector.broadcast %cst_32 : f32 to vector<8x512xf32>
    %117 = arith.mulf %115, %116 : vector<8x512xf32>
    %cst_33 = arith.constant 5.000000e-01 : f32
    %118 = vector.broadcast %cst_33 : f32 to vector<8x512xf32>
    %119 = arith.addf %117, %118 : vector<8x512xf32>
    %120 = arith.mulf %98, %119 : vector<8x512xf32>
    %121 = arith.cmpf ogt, %120, %35 : vector<8x512xf32>
    %cst_34 = arith.constant 1.000000e+00 : f32
    %cst_35 = arith.constant 0.000000e+00 : f32
    %122 = vector.broadcast %cst_34 : f32 to vector<8x512xf32>
    %123 = vector.broadcast %cst_35 : f32 to vector<8x512xf32>
    %124 = arith.select %121, %122, %123 : vector<8x512xi1>, vector<8x512xf32>
    %125 = arith.addf %103, %124 : vector<8x512xf32>
    %c13_i32_36 = arith.constant 13 : i32
    %126 = vector.broadcast %c13_i32_36 : i32 to vector<8x512xi32>
    %127 = arith.shli %114, %126 : vector<8x512xi32>
    %128 = arith.xori %114, %127 : vector<8x512xi32>
    %c17_i32_37 = arith.constant 17 : i32
    %129 = vector.broadcast %c17_i32_37 : i32 to vector<8x512xi32>
    %130 = arith.shrsi %128, %129 : vector<8x512xi32>
    %c32767_i32_38 = arith.constant 32767 : i32
    %131 = vector.broadcast %c32767_i32_38 : i32 to vector<8x512xi32>
    %132 = arith.andi %130, %131 : vector<8x512xi32>
    %133 = arith.xori %128, %132 : vector<8x512xi32>
    %c5_i32_39 = arith.constant 5 : i32
    %134 = vector.broadcast %c5_i32_39 : i32 to vector<8x512xi32>
    %135 = arith.shli %133, %134 : vector<8x512xi32>
    %136 = arith.xori %133, %135 : vector<8x512xi32>
    %137 = arith.sitofp %136 : vector<8x512xi32> to vector<8x512xf32>
    %cst_40 = arith.constant 2.32830644E-10 : f32
    %138 = vector.broadcast %cst_40 : f32 to vector<8x512xf32>
    %139 = arith.mulf %137, %138 : vector<8x512xf32>
    %cst_41 = arith.constant 5.000000e-01 : f32
    %140 = vector.broadcast %cst_41 : f32 to vector<8x512xf32>
    %141 = arith.addf %139, %140 : vector<8x512xf32>
    %142 = arith.mulf %120, %141 : vector<8x512xf32>
    %143 = arith.cmpf ogt, %142, %35 : vector<8x512xf32>
    %cst_42 = arith.constant 1.000000e+00 : f32
    %cst_43 = arith.constant 0.000000e+00 : f32
    %144 = vector.broadcast %cst_42 : f32 to vector<8x512xf32>
    %145 = vector.broadcast %cst_43 : f32 to vector<8x512xf32>
    %146 = arith.select %143, %144, %145 : vector<8x512xi1>, vector<8x512xf32>
    %147 = arith.addf %125, %146 : vector<8x512xf32>
    %c13_i32_44 = arith.constant 13 : i32
    %148 = vector.broadcast %c13_i32_44 : i32 to vector<8x512xi32>
    %149 = arith.shli %136, %148 : vector<8x512xi32>
    %150 = arith.xori %136, %149 : vector<8x512xi32>
    %c17_i32_45 = arith.constant 17 : i32
    %151 = vector.broadcast %c17_i32_45 : i32 to vector<8x512xi32>
    %152 = arith.shrsi %150, %151 : vector<8x512xi32>
    %c32767_i32_46 = arith.constant 32767 : i32
    %153 = vector.broadcast %c32767_i32_46 : i32 to vector<8x512xi32>
    %154 = arith.andi %152, %153 : vector<8x512xi32>
    %155 = arith.xori %150, %154 : vector<8x512xi32>
    %c5_i32_47 = arith.constant 5 : i32
    %156 = vector.broadcast %c5_i32_47 : i32 to vector<8x512xi32>
    %157 = arith.shli %155, %156 : vector<8x512xi32>
    %158 = arith.xori %155, %157 : vector<8x512xi32>
    %159 = arith.sitofp %158 : vector<8x512xi32> to vector<8x512xf32>
    %cst_48 = arith.constant 2.32830644E-10 : f32
    %160 = vector.broadcast %cst_48 : f32 to vector<8x512xf32>
    %161 = arith.mulf %159, %160 : vector<8x512xf32>
    %cst_49 = arith.constant 5.000000e-01 : f32
    %162 = vector.broadcast %cst_49 : f32 to vector<8x512xf32>
    %163 = arith.addf %161, %162 : vector<8x512xf32>
    %164 = arith.mulf %142, %163 : vector<8x512xf32>
    %165 = arith.cmpf ogt, %164, %35 : vector<8x512xf32>
    %cst_50 = arith.constant 1.000000e+00 : f32
    %cst_51 = arith.constant 0.000000e+00 : f32
    %166 = vector.broadcast %cst_50 : f32 to vector<8x512xf32>
    %167 = vector.broadcast %cst_51 : f32 to vector<8x512xf32>
    %168 = arith.select %165, %166, %167 : vector<8x512xi1>, vector<8x512xf32>
    %169 = arith.addf %147, %168 : vector<8x512xf32>
    %c13_i32_52 = arith.constant 13 : i32
    %170 = vector.broadcast %c13_i32_52 : i32 to vector<8x512xi32>
    %171 = arith.shli %158, %170 : vector<8x512xi32>
    %172 = arith.xori %158, %171 : vector<8x512xi32>
    %c17_i32_53 = arith.constant 17 : i32
    %173 = vector.broadcast %c17_i32_53 : i32 to vector<8x512xi32>
    %174 = arith.shrsi %172, %173 : vector<8x512xi32>
    %c32767_i32_54 = arith.constant 32767 : i32
    %175 = vector.broadcast %c32767_i32_54 : i32 to vector<8x512xi32>
    %176 = arith.andi %174, %175 : vector<8x512xi32>
    %177 = arith.xori %172, %176 : vector<8x512xi32>
    %c5_i32_55 = arith.constant 5 : i32
    %178 = vector.broadcast %c5_i32_55 : i32 to vector<8x512xi32>
    %179 = arith.shli %177, %178 : vector<8x512xi32>
    %180 = arith.xori %177, %179 : vector<8x512xi32>
    %181 = arith.sitofp %180 : vector<8x512xi32> to vector<8x512xf32>
    %cst_56 = arith.constant 2.32830644E-10 : f32
    %182 = vector.broadcast %cst_56 : f32 to vector<8x512xf32>
    %183 = arith.mulf %181, %182 : vector<8x512xf32>
    %cst_57 = arith.constant 5.000000e-01 : f32
    %184 = vector.broadcast %cst_57 : f32 to vector<8x512xf32>
    %185 = arith.addf %183, %184 : vector<8x512xf32>
    %186 = arith.mulf %164, %185 : vector<8x512xf32>
    %187 = arith.cmpf ogt, %186, %35 : vector<8x512xf32>
    %cst_58 = arith.constant 1.000000e+00 : f32
    %cst_59 = arith.constant 0.000000e+00 : f32
    %188 = vector.broadcast %cst_58 : f32 to vector<8x512xf32>
    %189 = vector.broadcast %cst_59 : f32 to vector<8x512xf32>
    %190 = arith.select %187, %188, %189 : vector<8x512xi1>, vector<8x512xf32>
    %191 = arith.addf %169, %190 : vector<8x512xf32>
    %c13_i32_60 = arith.constant 13 : i32
    %192 = vector.broadcast %c13_i32_60 : i32 to vector<8x512xi32>
    %193 = arith.shli %180, %192 : vector<8x512xi32>
    %194 = arith.xori %180, %193 : vector<8x512xi32>
    %c17_i32_61 = arith.constant 17 : i32
    %195 = vector.broadcast %c17_i32_61 : i32 to vector<8x512xi32>
    %196 = arith.shrsi %194, %195 : vector<8x512xi32>
    %c32767_i32_62 = arith.constant 32767 : i32
    %197 = vector.broadcast %c32767_i32_62 : i32 to vector<8x512xi32>
    %198 = arith.andi %196, %197 : vector<8x512xi32>
    %199 = arith.xori %194, %198 : vector<8x512xi32>
    %c5_i32_63 = arith.constant 5 : i32
    %200 = vector.broadcast %c5_i32_63 : i32 to vector<8x512xi32>
    %201 = arith.shli %199, %200 : vector<8x512xi32>
    %202 = arith.xori %199, %201 : vector<8x512xi32>
    %203 = arith.sitofp %202 : vector<8x512xi32> to vector<8x512xf32>
    %cst_64 = arith.constant 2.32830644E-10 : f32
    %204 = vector.broadcast %cst_64 : f32 to vector<8x512xf32>
    %205 = arith.mulf %203, %204 : vector<8x512xf32>
    %cst_65 = arith.constant 5.000000e-01 : f32
    %206 = vector.broadcast %cst_65 : f32 to vector<8x512xf32>
    %207 = arith.addf %205, %206 : vector<8x512xf32>
    %208 = arith.mulf %186, %207 : vector<8x512xf32>
    %209 = arith.cmpf ogt, %208, %35 : vector<8x512xf32>
    %cst_66 = arith.constant 1.000000e+00 : f32
    %cst_67 = arith.constant 0.000000e+00 : f32
    %210 = vector.broadcast %cst_66 : f32 to vector<8x512xf32>
    %211 = vector.broadcast %cst_67 : f32 to vector<8x512xf32>
    %212 = arith.select %209, %210, %211 : vector<8x512xi1>, vector<8x512xf32>
    %213 = arith.addf %191, %212 : vector<8x512xf32>
    %c13_i32_68 = arith.constant 13 : i32
    %214 = vector.broadcast %c13_i32_68 : i32 to vector<8x512xi32>
    %215 = arith.shli %202, %214 : vector<8x512xi32>
    %216 = arith.xori %202, %215 : vector<8x512xi32>
    %c17_i32_69 = arith.constant 17 : i32
    %217 = vector.broadcast %c17_i32_69 : i32 to vector<8x512xi32>
    %218 = arith.shrsi %216, %217 : vector<8x512xi32>
    %c32767_i32_70 = arith.constant 32767 : i32
    %219 = vector.broadcast %c32767_i32_70 : i32 to vector<8x512xi32>
    %220 = arith.andi %218, %219 : vector<8x512xi32>
    %221 = arith.xori %216, %220 : vector<8x512xi32>
    %c5_i32_71 = arith.constant 5 : i32
    %222 = vector.broadcast %c5_i32_71 : i32 to vector<8x512xi32>
    %223 = arith.shli %221, %222 : vector<8x512xi32>
    %224 = arith.xori %221, %223 : vector<8x512xi32>
    %225 = arith.sitofp %224 : vector<8x512xi32> to vector<8x512xf32>
    %cst_72 = arith.constant 2.32830644E-10 : f32
    %226 = vector.broadcast %cst_72 : f32 to vector<8x512xf32>
    %227 = arith.mulf %225, %226 : vector<8x512xf32>
    %cst_73 = arith.constant 5.000000e-01 : f32
    %228 = vector.broadcast %cst_73 : f32 to vector<8x512xf32>
    %229 = arith.addf %227, %228 : vector<8x512xf32>
    %230 = arith.mulf %208, %229 : vector<8x512xf32>
    %231 = arith.cmpf ogt, %230, %35 : vector<8x512xf32>
    %cst_74 = arith.constant 1.000000e+00 : f32
    %cst_75 = arith.constant 0.000000e+00 : f32
    %232 = vector.broadcast %cst_74 : f32 to vector<8x512xf32>
    %233 = vector.broadcast %cst_75 : f32 to vector<8x512xf32>
    %234 = arith.select %231, %232, %233 : vector<8x512xi1>, vector<8x512xf32>
    %235 = arith.addf %213, %234 : vector<8x512xf32>
    %c13_i32_76 = arith.constant 13 : i32
    %236 = vector.broadcast %c13_i32_76 : i32 to vector<8x512xi32>
    %237 = arith.shli %224, %236 : vector<8x512xi32>
    %238 = arith.xori %224, %237 : vector<8x512xi32>
    %c17_i32_77 = arith.constant 17 : i32
    %239 = vector.broadcast %c17_i32_77 : i32 to vector<8x512xi32>
    %240 = arith.shrsi %238, %239 : vector<8x512xi32>
    %c32767_i32_78 = arith.constant 32767 : i32
    %241 = vector.broadcast %c32767_i32_78 : i32 to vector<8x512xi32>
    %242 = arith.andi %240, %241 : vector<8x512xi32>
    %243 = arith.xori %238, %242 : vector<8x512xi32>
    %c5_i32_79 = arith.constant 5 : i32
    %244 = vector.broadcast %c5_i32_79 : i32 to vector<8x512xi32>
    %245 = arith.shli %243, %244 : vector<8x512xi32>
    %246 = arith.xori %243, %245 : vector<8x512xi32>
    %247 = arith.sitofp %246 : vector<8x512xi32> to vector<8x512xf32>
    %cst_80 = arith.constant 2.32830644E-10 : f32
    %248 = vector.broadcast %cst_80 : f32 to vector<8x512xf32>
    %249 = arith.mulf %247, %248 : vector<8x512xf32>
    %cst_81 = arith.constant 5.000000e-01 : f32
    %250 = vector.broadcast %cst_81 : f32 to vector<8x512xf32>
    %251 = arith.addf %249, %250 : vector<8x512xf32>
    %252 = arith.mulf %230, %251 : vector<8x512xf32>
    %253 = arith.cmpf ogt, %252, %35 : vector<8x512xf32>
    %cst_82 = arith.constant 1.000000e+00 : f32
    %cst_83 = arith.constant 0.000000e+00 : f32
    %254 = vector.broadcast %cst_82 : f32 to vector<8x512xf32>
    %255 = vector.broadcast %cst_83 : f32 to vector<8x512xf32>
    %256 = arith.select %253, %254, %255 : vector<8x512xi1>, vector<8x512xf32>
    %257 = arith.addf %235, %256 : vector<8x512xf32>
    %c13_i32_84 = arith.constant 13 : i32
    %258 = vector.broadcast %c13_i32_84 : i32 to vector<8x512xi32>
    %259 = arith.shli %246, %258 : vector<8x512xi32>
    %260 = arith.xori %246, %259 : vector<8x512xi32>
    %c17_i32_85 = arith.constant 17 : i32
    %261 = vector.broadcast %c17_i32_85 : i32 to vector<8x512xi32>
    %262 = arith.shrsi %260, %261 : vector<8x512xi32>
    %c32767_i32_86 = arith.constant 32767 : i32
    %263 = vector.broadcast %c32767_i32_86 : i32 to vector<8x512xi32>
    %264 = arith.andi %262, %263 : vector<8x512xi32>
    %265 = arith.xori %260, %264 : vector<8x512xi32>
    %c5_i32_87 = arith.constant 5 : i32
    %266 = vector.broadcast %c5_i32_87 : i32 to vector<8x512xi32>
    %267 = arith.shli %265, %266 : vector<8x512xi32>
    %268 = arith.xori %265, %267 : vector<8x512xi32>
    %269 = arith.sitofp %268 : vector<8x512xi32> to vector<8x512xf32>
    %cst_88 = arith.constant 2.32830644E-10 : f32
    %270 = vector.broadcast %cst_88 : f32 to vector<8x512xf32>
    %271 = arith.mulf %269, %270 : vector<8x512xf32>
    %cst_89 = arith.constant 5.000000e-01 : f32
    %272 = vector.broadcast %cst_89 : f32 to vector<8x512xf32>
    %273 = arith.addf %271, %272 : vector<8x512xf32>
    %274 = arith.mulf %252, %273 : vector<8x512xf32>
    %275 = arith.cmpf ogt, %274, %35 : vector<8x512xf32>
    %cst_90 = arith.constant 1.000000e+00 : f32
    %cst_91 = arith.constant 0.000000e+00 : f32
    %276 = vector.broadcast %cst_90 : f32 to vector<8x512xf32>
    %277 = vector.broadcast %cst_91 : f32 to vector<8x512xf32>
    %278 = arith.select %275, %276, %277 : vector<8x512xi1>, vector<8x512xf32>
    %279 = arith.addf %257, %278 : vector<8x512xf32>
    %c13_i32_92 = arith.constant 13 : i32
    %280 = vector.broadcast %c13_i32_92 : i32 to vector<8x512xi32>
    %281 = arith.shli %268, %280 : vector<8x512xi32>
    %282 = arith.xori %268, %281 : vector<8x512xi32>
    %c17_i32_93 = arith.constant 17 : i32
    %283 = vector.broadcast %c17_i32_93 : i32 to vector<8x512xi32>
    %284 = arith.shrsi %282, %283 : vector<8x512xi32>
    %c32767_i32_94 = arith.constant 32767 : i32
    %285 = vector.broadcast %c32767_i32_94 : i32 to vector<8x512xi32>
    %286 = arith.andi %284, %285 : vector<8x512xi32>
    %287 = arith.xori %282, %286 : vector<8x512xi32>
    %c5_i32_95 = arith.constant 5 : i32
    %288 = vector.broadcast %c5_i32_95 : i32 to vector<8x512xi32>
    %289 = arith.shli %287, %288 : vector<8x512xi32>
    %290 = arith.xori %287, %289 : vector<8x512xi32>
    %291 = arith.sitofp %290 : vector<8x512xi32> to vector<8x512xf32>
    %cst_96 = arith.constant 2.32830644E-10 : f32
    %292 = vector.broadcast %cst_96 : f32 to vector<8x512xf32>
    %293 = arith.mulf %291, %292 : vector<8x512xf32>
    %cst_97 = arith.constant 5.000000e-01 : f32
    %294 = vector.broadcast %cst_97 : f32 to vector<8x512xf32>
    %295 = arith.addf %293, %294 : vector<8x512xf32>
    %296 = arith.mulf %274, %295 : vector<8x512xf32>
    %297 = arith.cmpf ogt, %296, %35 : vector<8x512xf32>
    %cst_98 = arith.constant 1.000000e+00 : f32
    %cst_99 = arith.constant 0.000000e+00 : f32
    %298 = vector.broadcast %cst_98 : f32 to vector<8x512xf32>
    %299 = vector.broadcast %cst_99 : f32 to vector<8x512xf32>
    %300 = arith.select %297, %298, %299 : vector<8x512xi1>, vector<8x512xf32>
    %301 = arith.addf %279, %300 : vector<8x512xf32>
    %c13_i32_100 = arith.constant 13 : i32
    %302 = vector.broadcast %c13_i32_100 : i32 to vector<8x512xi32>
    %303 = arith.shli %290, %302 : vector<8x512xi32>
    %304 = arith.xori %290, %303 : vector<8x512xi32>
    %c17_i32_101 = arith.constant 17 : i32
    %305 = vector.broadcast %c17_i32_101 : i32 to vector<8x512xi32>
    %306 = arith.shrsi %304, %305 : vector<8x512xi32>
    %c32767_i32_102 = arith.constant 32767 : i32
    %307 = vector.broadcast %c32767_i32_102 : i32 to vector<8x512xi32>
    %308 = arith.andi %306, %307 : vector<8x512xi32>
    %309 = arith.xori %304, %308 : vector<8x512xi32>
    %c5_i32_103 = arith.constant 5 : i32
    %310 = vector.broadcast %c5_i32_103 : i32 to vector<8x512xi32>
    %311 = arith.shli %309, %310 : vector<8x512xi32>
    %312 = arith.xori %309, %311 : vector<8x512xi32>
    %313 = arith.sitofp %312 : vector<8x512xi32> to vector<8x512xf32>
    %cst_104 = arith.constant 2.32830644E-10 : f32
    %314 = vector.broadcast %cst_104 : f32 to vector<8x512xf32>
    %315 = arith.mulf %313, %314 : vector<8x512xf32>
    %cst_105 = arith.constant 5.000000e-01 : f32
    %316 = vector.broadcast %cst_105 : f32 to vector<8x512xf32>
    %317 = arith.addf %315, %316 : vector<8x512xf32>
    %318 = arith.mulf %296, %317 : vector<8x512xf32>
    %319 = arith.cmpf ogt, %318, %35 : vector<8x512xf32>
    %cst_106 = arith.constant 1.000000e+00 : f32
    %cst_107 = arith.constant 0.000000e+00 : f32
    %320 = vector.broadcast %cst_106 : f32 to vector<8x512xf32>
    %321 = vector.broadcast %cst_107 : f32 to vector<8x512xf32>
    %322 = arith.select %319, %320, %321 : vector<8x512xi1>, vector<8x512xf32>
    %323 = arith.addf %301, %322 : vector<8x512xf32>
    %c13_i32_108 = arith.constant 13 : i32
    %324 = vector.broadcast %c13_i32_108 : i32 to vector<8x512xi32>
    %325 = arith.shli %312, %324 : vector<8x512xi32>
    %326 = arith.xori %312, %325 : vector<8x512xi32>
    %c17_i32_109 = arith.constant 17 : i32
    %327 = vector.broadcast %c17_i32_109 : i32 to vector<8x512xi32>
    %328 = arith.shrsi %326, %327 : vector<8x512xi32>
    %c32767_i32_110 = arith.constant 32767 : i32
    %329 = vector.broadcast %c32767_i32_110 : i32 to vector<8x512xi32>
    %330 = arith.andi %328, %329 : vector<8x512xi32>
    %331 = arith.xori %326, %330 : vector<8x512xi32>
    %c5_i32_111 = arith.constant 5 : i32
    %332 = vector.broadcast %c5_i32_111 : i32 to vector<8x512xi32>
    %333 = arith.shli %331, %332 : vector<8x512xi32>
    %334 = arith.xori %331, %333 : vector<8x512xi32>
    %335 = arith.sitofp %334 : vector<8x512xi32> to vector<8x512xf32>
    %cst_112 = arith.constant 2.32830644E-10 : f32
    %336 = vector.broadcast %cst_112 : f32 to vector<8x512xf32>
    %337 = arith.mulf %335, %336 : vector<8x512xf32>
    %cst_113 = arith.constant 5.000000e-01 : f32
    %338 = vector.broadcast %cst_113 : f32 to vector<8x512xf32>
    %339 = arith.addf %337, %338 : vector<8x512xf32>
    %340 = arith.mulf %318, %339 : vector<8x512xf32>
    %341 = arith.cmpf ogt, %340, %35 : vector<8x512xf32>
    %cst_114 = arith.constant 1.000000e+00 : f32
    %cst_115 = arith.constant 0.000000e+00 : f32
    %342 = vector.broadcast %cst_114 : f32 to vector<8x512xf32>
    %343 = vector.broadcast %cst_115 : f32 to vector<8x512xf32>
    %344 = arith.select %341, %342, %343 : vector<8x512xi1>, vector<8x512xf32>
    %345 = arith.addf %323, %344 : vector<8x512xf32>
    %c13_i32_116 = arith.constant 13 : i32
    %346 = vector.broadcast %c13_i32_116 : i32 to vector<8x512xi32>
    %347 = arith.shli %334, %346 : vector<8x512xi32>
    %348 = arith.xori %334, %347 : vector<8x512xi32>
    %c17_i32_117 = arith.constant 17 : i32
    %349 = vector.broadcast %c17_i32_117 : i32 to vector<8x512xi32>
    %350 = arith.shrsi %348, %349 : vector<8x512xi32>
    %c32767_i32_118 = arith.constant 32767 : i32
    %351 = vector.broadcast %c32767_i32_118 : i32 to vector<8x512xi32>
    %352 = arith.andi %350, %351 : vector<8x512xi32>
    %353 = arith.xori %348, %352 : vector<8x512xi32>
    %c5_i32_119 = arith.constant 5 : i32
    %354 = vector.broadcast %c5_i32_119 : i32 to vector<8x512xi32>
    %355 = arith.shli %353, %354 : vector<8x512xi32>
    %356 = arith.xori %353, %355 : vector<8x512xi32>
    %357 = arith.sitofp %356 : vector<8x512xi32> to vector<8x512xf32>
    %cst_120 = arith.constant 2.32830644E-10 : f32
    %358 = vector.broadcast %cst_120 : f32 to vector<8x512xf32>
    %359 = arith.mulf %357, %358 : vector<8x512xf32>
    %cst_121 = arith.constant 5.000000e-01 : f32
    %360 = vector.broadcast %cst_121 : f32 to vector<8x512xf32>
    %361 = arith.addf %359, %360 : vector<8x512xf32>
    %362 = arith.mulf %340, %361 : vector<8x512xf32>
    %363 = arith.cmpf ogt, %362, %35 : vector<8x512xf32>
    %cst_122 = arith.constant 1.000000e+00 : f32
    %cst_123 = arith.constant 0.000000e+00 : f32
    %364 = vector.broadcast %cst_122 : f32 to vector<8x512xf32>
    %365 = vector.broadcast %cst_123 : f32 to vector<8x512xf32>
    %366 = arith.select %363, %364, %365 : vector<8x512xi1>, vector<8x512xf32>
    %367 = arith.addf %345, %366 : vector<8x512xf32>
    %c13_i32_124 = arith.constant 13 : i32
    %368 = vector.broadcast %c13_i32_124 : i32 to vector<8x512xi32>
    %369 = arith.shli %356, %368 : vector<8x512xi32>
    %370 = arith.xori %356, %369 : vector<8x512xi32>
    %c17_i32_125 = arith.constant 17 : i32
    %371 = vector.broadcast %c17_i32_125 : i32 to vector<8x512xi32>
    %372 = arith.shrsi %370, %371 : vector<8x512xi32>
    %c32767_i32_126 = arith.constant 32767 : i32
    %373 = vector.broadcast %c32767_i32_126 : i32 to vector<8x512xi32>
    %374 = arith.andi %372, %373 : vector<8x512xi32>
    %375 = arith.xori %370, %374 : vector<8x512xi32>
    %c5_i32_127 = arith.constant 5 : i32
    %376 = vector.broadcast %c5_i32_127 : i32 to vector<8x512xi32>
    %377 = arith.shli %375, %376 : vector<8x512xi32>
    %378 = arith.xori %375, %377 : vector<8x512xi32>
    %379 = arith.sitofp %378 : vector<8x512xi32> to vector<8x512xf32>
    %cst_128 = arith.constant 2.32830644E-10 : f32
    %380 = vector.broadcast %cst_128 : f32 to vector<8x512xf32>
    %381 = arith.mulf %379, %380 : vector<8x512xf32>
    %cst_129 = arith.constant 5.000000e-01 : f32
    %382 = vector.broadcast %cst_129 : f32 to vector<8x512xf32>
    %383 = arith.addf %381, %382 : vector<8x512xf32>
    %384 = arith.mulf %362, %383 : vector<8x512xf32>
    %385 = arith.cmpf ogt, %384, %35 : vector<8x512xf32>
    %cst_130 = arith.constant 1.000000e+00 : f32
    %cst_131 = arith.constant 0.000000e+00 : f32
    %386 = vector.broadcast %cst_130 : f32 to vector<8x512xf32>
    %387 = vector.broadcast %cst_131 : f32 to vector<8x512xf32>
    %388 = arith.select %385, %386, %387 : vector<8x512xi1>, vector<8x512xf32>
    %389 = arith.addf %367, %388 : vector<8x512xf32>
    %c13_i32_132 = arith.constant 13 : i32
    %390 = vector.broadcast %c13_i32_132 : i32 to vector<8x512xi32>
    %391 = arith.shli %378, %390 : vector<8x512xi32>
    %392 = arith.xori %378, %391 : vector<8x512xi32>
    %c17_i32_133 = arith.constant 17 : i32
    %393 = vector.broadcast %c17_i32_133 : i32 to vector<8x512xi32>
    %394 = arith.shrsi %392, %393 : vector<8x512xi32>
    %c32767_i32_134 = arith.constant 32767 : i32
    %395 = vector.broadcast %c32767_i32_134 : i32 to vector<8x512xi32>
    %396 = arith.andi %394, %395 : vector<8x512xi32>
    %397 = arith.xori %392, %396 : vector<8x512xi32>
    %c5_i32_135 = arith.constant 5 : i32
    %398 = vector.broadcast %c5_i32_135 : i32 to vector<8x512xi32>
    %399 = arith.shli %397, %398 : vector<8x512xi32>
    %400 = arith.xori %397, %399 : vector<8x512xi32>
    %401 = arith.sitofp %400 : vector<8x512xi32> to vector<8x512xf32>
    %cst_136 = arith.constant 2.32830644E-10 : f32
    %402 = vector.broadcast %cst_136 : f32 to vector<8x512xf32>
    %403 = arith.mulf %401, %402 : vector<8x512xf32>
    %cst_137 = arith.constant 5.000000e-01 : f32
    %404 = vector.broadcast %cst_137 : f32 to vector<8x512xf32>
    %405 = arith.addf %403, %404 : vector<8x512xf32>
    %406 = arith.mulf %384, %405 : vector<8x512xf32>
    %407 = arith.cmpf ogt, %406, %35 : vector<8x512xf32>
    %cst_138 = arith.constant 1.000000e+00 : f32
    %cst_139 = arith.constant 0.000000e+00 : f32
    %408 = vector.broadcast %cst_138 : f32 to vector<8x512xf32>
    %409 = vector.broadcast %cst_139 : f32 to vector<8x512xf32>
    %410 = arith.select %407, %408, %409 : vector<8x512xi1>, vector<8x512xf32>
    %411 = arith.addf %389, %410 : vector<8x512xf32>
    %c13_i32_140 = arith.constant 13 : i32
    %412 = vector.broadcast %c13_i32_140 : i32 to vector<8x512xi32>
    %413 = arith.shli %400, %412 : vector<8x512xi32>
    %414 = arith.xori %400, %413 : vector<8x512xi32>
    %c17_i32_141 = arith.constant 17 : i32
    %415 = vector.broadcast %c17_i32_141 : i32 to vector<8x512xi32>
    %416 = arith.shrsi %414, %415 : vector<8x512xi32>
    %c32767_i32_142 = arith.constant 32767 : i32
    %417 = vector.broadcast %c32767_i32_142 : i32 to vector<8x512xi32>
    %418 = arith.andi %416, %417 : vector<8x512xi32>
    %419 = arith.xori %414, %418 : vector<8x512xi32>
    %c5_i32_143 = arith.constant 5 : i32
    %420 = vector.broadcast %c5_i32_143 : i32 to vector<8x512xi32>
    %421 = arith.shli %419, %420 : vector<8x512xi32>
    %422 = arith.xori %419, %421 : vector<8x512xi32>
    %423 = arith.sitofp %422 : vector<8x512xi32> to vector<8x512xf32>
    %cst_144 = arith.constant 2.32830644E-10 : f32
    %424 = vector.broadcast %cst_144 : f32 to vector<8x512xf32>
    %425 = arith.mulf %423, %424 : vector<8x512xf32>
    %cst_145 = arith.constant 5.000000e-01 : f32
    %426 = vector.broadcast %cst_145 : f32 to vector<8x512xf32>
    %427 = arith.addf %425, %426 : vector<8x512xf32>
    %428 = arith.mulf %406, %427 : vector<8x512xf32>
    %429 = arith.cmpf ogt, %428, %35 : vector<8x512xf32>
    %cst_146 = arith.constant 1.000000e+00 : f32
    %cst_147 = arith.constant 0.000000e+00 : f32
    %430 = vector.broadcast %cst_146 : f32 to vector<8x512xf32>
    %431 = vector.broadcast %cst_147 : f32 to vector<8x512xf32>
    %432 = arith.select %429, %430, %431 : vector<8x512xi1>, vector<8x512xf32>
    %433 = arith.addf %411, %432 : vector<8x512xf32>
    %c0_148 = arith.constant 0 : index
    %c0_149 = arith.constant 0 : index
    %434 = vector.load %arg2[%c0_148, %c0_149] : memref<8x512xf32, #tpu.memory_space<vmem>>, vector<8x512xf32>
    %435 = arith.addf %434, %433 : vector<8x512xf32>
    %c0_150 = arith.constant 0 : index
    %c0_151 = arith.constant 0 : index
    %436 = vector.load %arg4[%c0_150, %c0_151] : memref<8x512xf32, #tpu.memory_space<vmem>>, vector<8x512xf32>
    tpu.vector_store %arg4[%c0_150, %c0_151], %435 {strides = array<i32>} : memref<8x512xf32, #tpu.memory_space<vmem>>, vector<8x512xf32>,
    return
  }
  func.func @transform_0(%arg0: i32) -> i32 {
    %c0_i32 = arith.constant 0 : i32
    %c0_i32_0 = arith.constant 0 : i32
    return %c0_i32 : i32
  }
  func.func @transform_1(%arg0: i32) -> (i32, i32) {
    %c0_i32 = arith.constant 0 : i32
    %c0_i32_0 = arith.constant 0 : i32
    return %arg0, %c0_i32 : i32, i32
  }
  func.func @transform_2(%arg0: i32) -> (i32, i32) {
    %c0_i32 = arith.constant 0 : i32
    %c0_i32_0 = arith.constant 0 : i32
    return %arg0, %c0_i32 : i32, i32
  }
  func.func @transform_3(%arg0: i32) -> (i32, i32) {
    %c0_i32 = arith.constant 0 : i32
    %c0_i32_0 = arith.constant 0 : i32
    return %arg0, %c0_i32 : i32, i32
  }
}

</mosaic_0001>

<llo_original>
// kernel: tpu_custom_call.1
$region0: #{tpu_custom_call.1}
  #allocation0 [shape = 'u32[]', space=smem, size = 0x4, offset = 0x4, fixed_abs, tag = 'smem constant byte address 0x4 - core index']
  #allocation1 [shape = 'u32[144,128]{1,0:T(1,128)}', space=vmem, size = 0x12000, scoped, tag = 'internal scratch']
  #allocation2 [shape = 's32[1]{0:T(128)S(6)}', space=smem, size = 0x200, scoped, tag = 'scoped memory for tpu_custom_call.1']
  %s0 = inlined_call_operand.<no memory space> [shape: s32[1], index: 0, kind: input, shape index: {}]
  %s1 = inlined_call_operand.hbm [shape: f32[8,512], index: 1, kind: input, shape index: {}]
  %s2 = inlined_call_operand.hbm [shape: f32[8,512], index: 2, kind: input, shape index: {}]
  %s3 = inlined_call_operand.hbm [shape: f32[8,512], index: 3, kind: output, shape index: {}]
  %s4 = sld [smem:[#allocation0]]
  $region30: #{tpu_custom_call.1} parent=0
    _
  %s6 = ssub.s32 1, %s4
  %s7 = scalar_select 0, %s6, %s4
  %8 = sst [smem:[#allocation2]] %s0
  $region1: #{tpu_custom_call.1} parent=0
    #allocation3 [shape = 'u8[16384]{0}', space=vmem, size = 0x4000, scoped, tag = 'input window, operand 1, single buffered']
    #allocation4 [shape = 's32[1]{0}', space=sflag, size = 0x4, scoped, tag = 'scoped memory for tpu_custom_call.1']
    #allocation5 [shape = 's32[1]{0}', space=sflag, size = 0x4, scoped, tag = 'scoped memory for tpu_custom_call.1']
    #allocation6 [shape = 'u8[16384]{0}', space=vmem, size = 0x4000, scoped, tag = 'input window, operand 2, single buffered']
    #allocation7 [shape = 's32[1]{0}', space=sflag, size = 0x4, scoped, tag = 'scoped memory for tpu_custom_call.1']
    #allocation8 [shape = 'u8[16384]{0}', space=vmem, size = 0x4000, scoped, tag = 'output window, operand 0, single buffered']
    %9 = vsyncpa [#allocation4], 0
    %10 = vsyncpa [#allocation7], 0
    %11 = vsyncpa [#allocation5], 0
    // Predicated region
    $region2: #{tpu_custom_call.1} parent=1 // pred_check
      _
    $region3: #{tpu_custom_call.1} parent=1 // pred_check_branch
      %13 = sbr.rel (0) target = $region5
    $region4: #{tpu_custom_call.1} parent=1 // pred_region
      _
    $region5: #{tpu_custom_call.1} parent=1 // pred_fallthru
      _
    // Predicated region
    $region6: #{tpu_custom_call.1} parent=1 // pred_check
      _
    $region7: #{tpu_custom_call.1} parent=1 // pred_check_branch
      %15 = sbr.rel (0) target = $region9
    $region8: #{tpu_custom_call.1} parent=1 // pred_region
      %s17 = ssub.s32 512, 512
      %18 = vsyncadd [#allocation4], %s17
      %s20 = sshll.u32 [#allocation3], 4
      %s21 = int_to_ptr.vmem [resolvable:$true] %s20
      %23 = dma.hbm_to_vmem [thread:$0]  %s1, 512, %s21, [#allocation4]
    $region9: #{tpu_custom_call.1} parent=1 // pred_fallthru
      _
    // Predicated region
    $region10: #{tpu_custom_call.1} parent=1 // pred_check
      _
    $region11: #{tpu_custom_call.1} parent=1 // pred_check_branch
      %25 = sbr.rel (0) target = $region13
    $region12: #{tpu_custom_call.1} parent=1 // pred_region
      %s27 = ssub.s32 512, 512
      %28 = vsyncadd [#allocation7], %s27
      %s30 = sshll.u32 [#allocation6], 4
      %s31 = int_to_ptr.vmem [resolvable:$true] %s30
      %33 = dma.hbm_to_vmem [thread:$0]  %s2, 512, %s31, [#allocation7]
    $region13: #{tpu_custom_call.1} parent=1 // pred_fallthru
      _
    // Predicated region
    $region14: #{tpu_custom_call.1} parent=1 // pred_check
      _
    $region15: #{tpu_custom_call.1} parent=1 // pred_check_branch
      %35 = sbr.rel (0) target = $region17
    $region16: #{tpu_custom_call.1} parent=1 // pred_region
      %36 = dma.done [#allocation4], 512
    $region17: #{tpu_custom_call.1} parent=1 // pred_fallthru
      _
    // Predicated region
    $region18: #{tpu_custom_call.1} parent=1 // pred_check
      _
    $region19: #{tpu_custom_call.1} parent=1 // pred_check_branch
      %38 = sbr.rel (0) target = $region21
    $region20: #{tpu_custom_call.1} parent=1 // pred_region
      %39 = dma.done [#allocation7], 512
    $region21: #{tpu_custom_call.1} parent=1 // pred_fallthru
      _
    %v40 = vlaneseq
    %v41 = vshrl.u32 %v40, 7
    %v42 = vlaneseq
    %v43 = vand.u32 %v42, 127
    %v44 = vadd.s32 %v43, 128
    %v45 = vadd.s32 %v43, 256
    %v46 = vadd.s32 %v43, 384
    %s47 = smul.u32 0, 8
    %v48 = vstv %s47
    %v49 = vadd.s32 %v48, %v41
    %v50 = vmul.u32 %v49, 512
    %v51 = vadd.s32 %v50, %v43
    %v52 = vadd.s32 %v50, %v44
    %v53 = vadd.s32 %v50, %v45
    %v54 = vadd.s32 %v50, %v46
    %s55 = sld [smem:[#allocation2]]
    %v56 = vstv %s55
    %v57 = vxor.u32 %v51, %v56
    %v58 = vxor.u32 %v52, %v56
    %v59 = vxor.u32 %v53, %v56
    %v60 = vxor.u32 %v54, %v56
    %v61 = vshra.s32 %v57, 16
    %v62 = vshra.s32 %v58, 16
    %v63 = vshra.s32 %v59, 16
    %v64 = vshra.s32 %v60, 16
    %v65 = vand.u32 %v61, 65535
    %v66 = vand.u32 %v62, 65535
    %v67 = vand.u32 %v63, 65535
    %v68 = vand.u32 %v64, 65535
    %v69 = vxor.u32 %v57, %v65
    %v70 = vxor.u32 %v58, %v66
    %v71 = vxor.u32 %v59, %v67
    %v72 = vxor.u32 %v60, %v68
    %v73 = vmul.u32 %v69, 2246822507
    %v74 = vmul.u32 %v70, 2246822507
    %v75 = vmul.u32 %v71, 2246822507
    %v76 = vmul.u32 %v72, 2246822507
    %v77 = vshra.s32 %v73, 13
    %v78 = vshra.s32 %v74, 13
    %v79 = vshra.s32 %v75, 13
    %v80 = vshra.s32 %v76, 13
    %v81 = vand.u32 %v77, 524287
    %v82 = vand.u32 %v78, 524287
    %v83 = vand.u32 %v79, 524287
    %v84 = vand.u32 %v80, 524287
    %v85 = vxor.u32 %v73, %v81
    %v86 = vxor.u32 %v74, %v82
    %v87 = vxor.u32 %v75, %v83
    %v88 = vxor.u32 %v76, %v84
    %v89 = vmul.u32 %v85, 3266489909
    %v90 = vmul.u32 %v86, 3266489909
    %v91 = vmul.u32 %v87, 3266489909
    %v92 = vmul.u32 %v88, 3266489909
    %v93 = vshra.s32 %v89, 16
    %v94 = vshra.s32 %v90, 16
    %v95 = vshra.s32 %v91, 16
    %v96 = vshra.s32 %v92, 16
    %v97 = vand.u32 %v93, 65535
    %v98 = vand.u32 %v94, 65535
    %v99 = vand.u32 %v95, 65535
    %v100 = vand.u32 %v96, 65535
    %v101 = vxor.u32 %v89, %v97
    %v102 = vxor.u32 %v90, %v98
    %v103 = vxor.u32 %v91, %v99
    %v104 = vxor.u32 %v92, %v100
    %v105 = vld [vmem:[#allocation6] sm:$0xff]
    %v106 = vld [vmem:[#allocation6 + $0x8] sm:$0xff]
    %v107 = vld [vmem:[#allocation6 + $0x10] sm:$0xff]
    %v108 = vld [vmem:[#allocation6 + $0x18] sm:$0xff]
    %v109 = vmax.f32 %v105, 0.0
    %v110 = vmax.f32 %v106, 0.0
    %v111 = vmax.f32 %v107, 0.0
    %v112 = vmax.f32 %v108, 0.0
    %v113 = vsub.f32 0.0, %v109
    %v114 = vsub.f32 0.0, %v110
    %v115 = vsub.f32 0.0, %v111
    %v116 = vsub.f32 0.0, %v112
    %v117 = vmul.f32 %v113, 1.442695
    %v118 = vpow.pop %v117
    %v119 = vmul.f32 %v114, 1.442695
    %v120 = vpow.pop %v119
    %v121 = vmul.f32 %v115, 1.442695
    %v122 = vpow.pop %v121
    %v123 = vmul.f32 %v116, 1.442695
    %v124 = vpow.pop %v123
    %v125 = vshll.u32 %v101, 13
    %v126 = vshll.u32 %v102, 13
    %v127 = vshll.u32 %v103, 13
    %v128 = vshll.u32 %v104, 13
    %v129 = vxor.u32 %v101, %v125
    %v130 = vxor.u32 %v102, %v126
    %v131 = vxor.u32 %v103, %v127
    %v132 = vxor.u32 %v104, %v128
    %v133 = vshra.s32 %v129, 17
    %v134 = vshra.s32 %v130, 17
    %v135 = vshra.s32 %v131, 17
    %v136 = vshra.s32 %v132, 17
    %v137 = vand.u32 %v133, 32767
    %v138 = vand.u32 %v134, 32767
    %v139 = vand.u32 %v135, 32767
    %v140 = vand.u32 %v136, 32767
    %v141 = vxor.u32 %v129, %v137
    %v142 = vxor.u32 %v130, %v138
    %v143 = vxor.u32 %v131, %v139
    %v144 = vxor.u32 %v132, %v140
    %v145 = vshll.u32 %v141, 5
    %v146 = vshll.u32 %v142, 5
    %v147 = vshll.u32 %v143, 5
    %v148 = vshll.u32 %v144, 5
    %v149 = vxor.u32 %v141, %v145
    %v150 = vxor.u32 %v142, %v146
    %v151 = vxor.u32 %v143, %v147
    %v152 = vxor.u32 %v144, %v148
    %v153 = vcvt.s32.f32 %v149
    %v154 = vcvt.s32.f32 %v150
    %v155 = vcvt.s32.f32 %v151
    %v156 = vcvt.s32.f32 %v152
    %v157 = vmul.f32 %v153, 2.3283064e-10
    %v158 = vmul.f32 %v154, 2.3283064e-10
    %v159 = vmul.f32 %v155, 2.3283064e-10
    %v160 = vmul.f32 %v156, 2.3283064e-10
    %v161 = vadd.f32 %v157, 0.5
    %v162 = vadd.f32 %v158, 0.5
    %v163 = vadd.f32 %v159, 0.5
    %v164 = vadd.f32 %v160, 0.5
    %vm165 = vcmp.gt.f32.partialorder %v161, %v118
    %vm166 = vcmp.gt.f32.partialorder %v162, %v120
    %vm167 = vcmp.gt.f32.partialorder %v163, %v122
    %vm168 = vcmp.gt.f32.partialorder %v164, %v124
    %v169 = vsel %vm165, 1.0, 0.0
    %v170 = vsel %vm166, 1.0, 0.0
    %v171 = vsel %vm167, 1.0, 0.0
    %v172 = vsel %vm168, 1.0, 0.0
    %v173 = vadd.f32 %v169, 0.0
    %v174 = vadd.f32 %v170, 0.0
    %v175 = vadd.f32 %v171, 0.0
    %v176 = vadd.f32 %v172, 0.0
    %v177 = vshll.u32 %v149, 13
    %v178 = vshll.u32 %v150, 13
    %v179 = vshll.u32 %v151, 13
    %v180 = vshll.u32 %v152, 13
    %v181 = vxor.u32 %v149, %v177
    %v182 = vxor.u32 %v150, %v178
    %v183 = vxor.u32 %v151, %v179
    %v184 = vxor.u32 %v152, %v180
    %v185 = vshra.s32 %v181, 17
    %v186 = vshra.s32 %v182, 17
    %v187 = vshra.s32 %v183, 17
    %v188 = vshra.s32 %v184, 17
    %v189 = vand.u32 %v185, 32767
    %v190 = vand.u32 %v186, 32767
    %v191 = vand.u32 %v187, 32767
    %v192 = vand.u32 %v188, 32767
    %v193 = vxor.u32 %v181, %v189
    %v194 = vxor.u32 %v182, %v190
    %v195 = vxor.u32 %v183, %v191
    %v196 = vxor.u32 %v184, %v192
    %v197 = vshll.u32 %v193, 5
    %v198 = vshll.u32 %v194, 5
    %v199 = vshll.u32 %v195, 5
    %v200 = vshll.u32 %v196, 5
    %v201 = vxor.u32 %v193, %v197
    %v202 = vxor.u32 %v194, %v198
    %v203 = vxor.u32 %v195, %v199
    %v204 = vxor.u32 %v196, %v200
    %v205 = vcvt.s32.f32 %v201
    %v206 = vcvt.s32.f32 %v202
    %v207 = vcvt.s32.f32 %v203
    %v208 = vcvt.s32.f32 %v204
    %v209 = vmul.f32 %v205, 2.3283064e-10
    %v210 = vmul.f32 %v206, 2.3283064e-10
    %v211 = vmul.f32 %v207, 2.3283064e-10
    %v212 = vmul.f32 %v208, 2.3283064e-10
    %v213 = vadd.f32 %v209, 0.5
    %v214 = vadd.f32 %v210, 0.5
    %v215 = vadd.f32 %v211, 0.5
    %v216 = vadd.f32 %v212, 0.5
    %v217 = vmul.f32 %v161, %v213
    %v218 = vmul.f32 %v162, %v214
    %v219 = vmul.f32 %v163, %v215
    %v220 = vmul.f32 %v164, %v216
    %vm221 = vcmp.gt.f32.partialorder %v217, %v118
    %vm222 = vcmp.gt.f32.partialorder %v218, %v120
    %vm223 = vcmp.gt.f32.partialorder %v219, %v122
    %vm224 = vcmp.gt.f32.partialorder %v220, %v124
    %v225 = vsel %vm221, 1.0, 0.0
    %v226 = vsel %vm222, 1.0, 0.0
    %v227 = vsel %vm223, 1.0, 0.0
    %v228 = vsel %vm224, 1.0, 0.0
    %v229 = vadd.f32 %v173, %v225
    %v230 = vadd.f32 %v174, %v226
    %v231 = vadd.f32 %v175, %v227
    %v232 = vadd.f32 %v176, %v228
    %v233 = vshll.u32 %v201, 13
    %v234 = vshll.u32 %v202, 13
    %v235 = vshll.u32 %v203, 13
    %v236 = vshll.u32 %v204, 13
    %v237 = vxor.u32 %v201, %v233
    %v238 = vxor.u32 %v202, %v234
    %v239 = vxor.u32 %v203, %v235
    %v240 = vxor.u32 %v204, %v236
    %v241 = vshra.s32 %v237, 17
    %v242 = vshra.s32 %v238, 17
    %v243 = vshra.s32 %v239, 17
    %v244 = vshra.s32 %v240, 17
    %v245 = vand.u32 %v241, 32767
    %v246 = vand.u32 %v242, 32767
    %v247 = vand.u32 %v243, 32767
    %v248 = vand.u32 %v244, 32767
    %v249 = vxor.u32 %v237, %v245
    %v250 = vxor.u32 %v238, %v246
    %v251 = vxor.u32 %v239, %v247
    %v252 = vxor.u32 %v240, %v248
    %v253 = vshll.u32 %v249, 5
    %v254 = vshll.u32 %v250, 5
    %v255 = vshll.u32 %v251, 5
    %v256 = vshll.u32 %v252, 5
    %v257 = vxor.u32 %v249, %v253
    %v258 = vxor.u32 %v250, %v254
    %v259 = vxor.u32 %v251, %v255
    %v260 = vxor.u32 %v252, %v256
    %v261 = vcvt.s32.f32 %v257
    %v262 = vcvt.s32.f32 %v258
    %v263 = vcvt.s32.f32 %v259
    %v264 = vcvt.s32.f32 %v260
    %v265 = vmul.f32 %v261, 2.3283064e-10
    %v266 = vmul.f32 %v262, 2.3283064e-10
    %v267 = vmul.f32 %v263, 2.3283064e-10
    %v268 = vmul.f32 %v264, 2.3283064e-10
    %v269 = vadd.f32 %v265, 0.5
    %v270 = vadd.f32 %v266, 0.5
    %v271 = vadd.f32 %v267, 0.5
    %v272 = vadd.f32 %v268, 0.5
    %v273 = vmul.f32 %v217, %v269
    %v274 = vmul.f32 %v218, %v270
    %v275 = vmul.f32 %v219, %v271
    %v276 = vmul.f32 %v220, %v272
    %vm277 = vcmp.gt.f32.partialorder %v273, %v118
    %vm278 = vcmp.gt.f32.partialorder %v274, %v120
    %vm279 = vcmp.gt.f32.partialorder %v275, %v122
    %vm280 = vcmp.gt.f32.partialorder %v276, %v124
    %v281 = vsel %vm277, 1.0, 0.0
    %v282 = vsel %vm278, 1.0, 0.0
    %v283 = vsel %vm279, 1.0, 0.0
    %v284 = vsel %vm280, 1.0, 0.0
    %v285 = vadd.f32 %v229, %v281
    %v286 = vadd.f32 %v230, %v282
    %v287 = vadd.f32 %v231, %v283
    %v288 = vadd.f32 %v232, %v284
    %v289 = vshll.u32 %v257, 13
    %v290 = vshll.u32 %v258, 13
    %v291 = vshll.u32 %v259, 13
    %v292 = vshll.u32 %v260, 13
    %v293 = vxor.u32 %v257, %v289
    %v294 = vxor.u32 %v258, %v290
    %v295 = vxor.u32 %v259, %v291
    %v296 = vxor.u32 %v260, %v292
    %v297 = vshra.s32 %v293, 17
    %v298 = vshra.s32 %v294, 17
    %v299 = vshra.s32 %v295, 17
    %v300 = vshra.s32 %v296, 17
    %v301 = vand.u32 %v297, 32767
    %v302 = vand.u32 %v298, 32767
    %v303 = vand.u32 %v299, 32767
    %v304 = vand.u32 %v300, 32767
    %v305 = vxor.u32 %v293, %v301
    %v306 = vxor.u32 %v294, %v302
    %v307 = vxor.u32 %v295, %v303
    %v308 = vxor.u32 %v296, %v304
    %v309 = vshll.u32 %v305, 5
    %v310 = vshll.u32 %v306, 5
    %v311 = vshll.u32 %v307, 5
    %v312 = vshll.u32 %v308, 5
    %v313 = vxor.u32 %v305, %v309
    %v314 = vxor.u32 %v306, %v310
    %v315 = vxor.u32 %v307, %v311
    %v316 = vxor.u32 %v308, %v312
    %v317 = vcvt.s32.f32 %v313
    %v318 = vcvt.s32.f32 %v314
    %v319 = vcvt.s32.f32 %v315
    %v320 = vcvt.s32.f32 %v316
    %v321 = vmul.f32 %v317, 2.3283064e-10
    %v322 = vmul.f32 %v318, 2.3283064e-10
    %v323 = vmul.f32 %v319, 2.3283064e-10
    %v324 = vmul.f32 %v320, 2.3283064e-10
    %v325 = vadd.f32 %v321, 0.5
    %v326 = vadd.f32 %v322, 0.5
    %v327 = vadd.f32 %v323, 0.5
    %v328 = vadd.f32 %v324, 0.5
    %v329 = vmul.f32 %v273, %v325
    %v330 = vmul.f32 %v274, %v326
    %v331 = vmul.f32 %v275, %v327
    %v332 = vmul.f32 %v276, %v328
    %vm333 = vcmp.gt.f32.partialorder %v329, %v118
    %vm334 = vcmp.gt.f32.partialorder %v330, %v120
    %vm335 = vcmp.gt.f32.partialorder %v331, %v122
    %vm336 = vcmp.gt.f32.partialorder %v332, %v124
    %v337 = vsel %vm333, 1.0, 0.0
    %v338 = vsel %vm334, 1.0, 0.0
    %v339 = vsel %vm335, 1.0, 0.0
    %v340 = vsel %vm336, 1.0, 0.0
    %v341 = vadd.f32 %v285, %v337
    %v342 = vadd.f32 %v286, %v338
    %v343 = vadd.f32 %v287, %v339
    %v344 = vadd.f32 %v288, %v340
    %v345 = vshll.u32 %v313, 13
    %v346 = vshll.u32 %v314, 13
    %v347 = vshll.u32 %v315, 13
    %v348 = vshll.u32 %v316, 13
    %v349 = vxor.u32 %v313, %v345
    %v350 = vxor.u32 %v314, %v346
    %v351 = vxor.u32 %v315, %v347
    %v352 = vxor.u32 %v316, %v348
    %v353 = vshra.s32 %v349, 17
    %v354 = vshra.s32 %v350, 17
    %v355 = vshra.s32 %v351, 17
    %v356 = vshra.s32 %v352, 17
    %v357 = vand.u32 %v353, 32767
    %v358 = vand.u32 %v354, 32767
    %v359 = vand.u32 %v355, 32767
    %v360 = vand.u32 %v356, 32767
    %v361 = vxor.u32 %v349, %v357
    %v362 = vxor.u32 %v350, %v358
    %v363 = vxor.u32 %v351, %v359
    %v364 = vxor.u32 %v352, %v360
    %v365 = vshll.u32 %v361, 5
    %v366 = vshll.u32 %v362, 5
    %v367 = vshll.u32 %v363, 5
    %v368 = vshll.u32 %v364, 5
    %v369 = vxor.u32 %v361, %v365
    %v370 = vxor.u32 %v362, %v366
    %v371 = vxor.u32 %v363, %v367
    %v372 = vxor.u32 %v364, %v368
    %v373 = vcvt.s32.f32 %v369
    %v374 = vcvt.s32.f32 %v370
    %v375 = vcvt.s32.f32 %v371
    %v376 = vcvt.s32.f32 %v372
    %v377 = vmul.f32 %v373, 2.3283064e-10
    %v378 = vmul.f32 %v374, 2.3283064e-10
    %v379 = vmul.f32 %v375, 2.3283064e-10
    %v380 = vmul.f32 %v376, 2.3283064e-10
    %v381 = vadd.f32 %v377, 0.5
    %v382 = vadd.f32 %v378, 0.5
    %v383 = vadd.f32 %v379, 0.5
    %v384 = vadd.f32 %v380, 0.5
    %v385 = vmul.f32 %v329, %v381
    %v386 = vmul.f32 %v330, %v382
    %v387 = vmul.f32 %v331, %v383
    %v388 = vmul.f32 %v332, %v384
    %vm389 = vcmp.gt.f32.partialorder %v385, %v118
    %vm390 = vcmp.gt.f32.partialorder %v386, %v120
    %vm391 = vcmp.gt.f32.partialorder %v387, %v122
    %vm392 = vcmp.gt.f32.partialorder %v388, %v124
    %v393 = vsel %vm389, 1.0, 0.0
    %v394 = vsel %vm390, 1.0, 0.0
    %v395 = vsel %vm391, 1.0, 0.0
    %v396 = vsel %vm392, 1.0, 0.0
    %v397 = vadd.f32 %v341, %v393
    %v398 = vadd.f32 %v342, %v394
    %v399 = vadd.f32 %v343, %v395
    %v400 = vadd.f32 %v344, %v396
    %v401 = vshll.u32 %v369, 13
    %v402 = vshll.u32 %v370, 13
    %v403 = vshll.u32 %v371, 13
    %v404 = vshll.u32 %v372, 13
    %v405 = vxor.u32 %v369, %v401
    %v406 = vxor.u32 %v370, %v402
    %v407 = vxor.u32 %v371, %v403
    %v408 = vxor.u32 %v372, %v404
    %v409 = vshra.s32 %v405, 17
    %v410 = vshra.s32 %v406, 17
    %v411 = vshra.s32 %v407, 17
    %v412 = vshra.s32 %v408, 17
    %v413 = vand.u32 %v409, 32767
    %v414 = vand.u32 %v410, 32767
    %v415 = vand.u32 %v411, 32767
    %v416 = vand.u32 %v412, 32767
    %v417 = vxor.u32 %v405, %v413
    %v418 = vxor.u32 %v406, %v414
    %v419 = vxor.u32 %v407, %v415
    %v420 = vxor.u32 %v408, %v416
    %v421 = vshll.u32 %v417, 5
    %v422 = vshll.u32 %v418, 5
    %v423 = vshll.u32 %v419, 5
    %v424 = vshll.u32 %v420, 5
    %v425 = vxor.u32 %v417, %v421
    %v426 = vxor.u32 %v418, %v422
    %v427 = vxor.u32 %v419, %v423
    %v428 = vxor.u32 %v420, %v424
    %v429 = vcvt.s32.f32 %v425
    %v430 = vcvt.s32.f32 %v426
    %v431 = vcvt.s32.f32 %v427
    %v432 = vcvt.s32.f32 %v428
    %v433 = vmul.f32 %v429, 2.3283064e-10
    %v434 = vmul.f32 %v430, 2.3283064e-10
    %v435 = vmul.f32 %v431, 2.3283064e-10
    %v436 = vmul.f32 %v432, 2.3283064e-10
    %v437 = vadd.f32 %v433, 0.5
    %v438 = vadd.f32 %v434, 0.5
    %v439 = vadd.f32 %v435, 0.5
    %v440 = vadd.f32 %v436, 0.5
    %v441 = vmul.f32 %v385, %v437
    %v442 = vmul.f32 %v386, %v438
    %v443 = vmul.f32 %v387, %v439
    %v444 = vmul.f32 %v388, %v440
    %vm445 = vcmp.gt.f32.partialorder %v441, %v118
    %vm446 = vcmp.gt.f32.partialorder %v442, %v120
    %vm447 = vcmp.gt.f32.partialorder %v443, %v122
    %vm448 = vcmp.gt.f32.partialorder %v444, %v124
    %v449 = vsel %vm445, 1.0, 0.0
    %v450 = vsel %vm446, 1.0, 0.0
    %v451 = vsel %vm447, 1.0, 0.0
    %v452 = vsel %vm448, 1.0, 0.0
    %v453 = vadd.f32 %v397, %v449
    %v454 = vadd.f32 %v398, %v450
    %v455 = vadd.f32 %v399, %v451
    %v456 = vadd.f32 %v400, %v452
    %v457 = vshll.u32 %v425, 13
    %v458 = vshll.u32 %v426, 13
    %v459 = vshll.u32 %v427, 13
    %v460 = vshll.u32 %v428, 13
    %v461 = vxor.u32 %v425, %v457
    %v462 = vxor.u32 %v426, %v458
    %v463 = vxor.u32 %v427, %v459
    %v464 = vxor.u32 %v428, %v460
    %v465 = vshra.s32 %v461, 17
    %v466 = vshra.s32 %v462, 17
    %v467 = vshra.s32 %v463, 17
    %v468 = vshra.s32 %v464, 17
    %v469 = vand.u32 %v465, 32767
    %v470 = vand.u32 %v466, 32767
    %v471 = vand.u32 %v467, 32767
    %v472 = vand.u32 %v468, 32767
    %v473 = vxor.u32 %v461, %v469
    %v474 = vxor.u32 %v462, %v470
    %v475 = vxor.u32 %v463, %v471
    %v476 = vxor.u32 %v464, %v472
    %v477 = vshll.u32 %v473, 5
    %v478 = vshll.u32 %v474, 5
    %v479 = vshll.u32 %v475, 5
    %v480 = vshll.u32 %v476, 5
    %v481 = vxor.u32 %v473, %v477
    %v482 = vxor.u32 %v474, %v478
    %v483 = vxor.u32 %v475, %v479
    %v484 = vxor.u32 %v476, %v480
    %v485 = vcvt.s32.f32 %v481
    %v486 = vcvt.s32.f32 %v482
    %v487 = vcvt.s32.f32 %v483
    %v488 = vcvt.s32.f32 %v484
    %v489 = vmul.f32 %v485, 2.3283064e-10
    %v490 = vmul.f32 %v486, 2.3283064e-10
    %v491 = vmul.f32 %v487, 2.3283064e-10
    %v492 = vmul.f32 %v488, 2.3283064e-10
    %v493 = vadd.f32 %v489, 0.5
    %v494 = vadd.f32 %v490, 0.5
    %v495 = vadd.f32 %v491, 0.5
    %v496 = vadd.f32 %v492, 0.5
    %v497 = vmul.f32 %v441, %v493
    %v498 = vmul.f32 %v442, %v494
    %v499 = vmul.f32 %v443, %v495
    %v500 = vmul.f32 %v444, %v496
    %vm501 = vcmp.gt.f32.partialorder %v497, %v118
    %vm502 = vcmp.gt.f32.partialorder %v498, %v120
    %vm503 = vcmp.gt.f32.partialorder %v499, %v122
    %vm504 = vcmp.gt.f32.partialorder %v500, %v124
    %v505 = vsel %vm501, 1.0, 0.0
    %v506 = vsel %vm502, 1.0, 0.0
    %v507 = vsel %vm503, 1.0, 0.0
    %v508 = vsel %vm504, 1.0, 0.0
    %v509 = vadd.f32 %v453, %v505
    %v510 = vadd.f32 %v454, %v506
    %v511 = vadd.f32 %v455, %v507
    %v512 = vadd.f32 %v456, %v508
    %v513 = vshll.u32 %v481, 13
    %v514 = vshll.u32 %v482, 13
    %v515 = vshll.u32 %v483, 13
    %v516 = vshll.u32 %v484, 13
    %v517 = vxor.u32 %v481, %v513
    %v518 = vxor.u32 %v482, %v514
    %v519 = vxor.u32 %v483, %v515
    %v520 = vxor.u32 %v484, %v516
    %v521 = vshra.s32 %v517, 17
    %v522 = vshra.s32 %v518, 17
    %v523 = vshra.s32 %v519, 17
    %v524 = vshra.s32 %v520, 17
    %v525 = vand.u32 %v521, 32767
    %v526 = vand.u32 %v522, 32767
    %v527 = vand.u32 %v523, 32767
    %v528 = vand.u32 %v524, 32767
    %v529 = vxor.u32 %v517, %v525
    %v530 = vxor.u32 %v518, %v526
    %v531 = vxor.u32 %v519, %v527
    %v532 = vxor.u32 %v520, %v528
    %v533 = vshll.u32 %v529, 5
    %v534 = vshll.u32 %v530, 5
    %v535 = vshll.u32 %v531, 5
    %v536 = vshll.u32 %v532, 5
    %v537 = vxor.u32 %v529, %v533
    %v538 = vxor.u32 %v530, %v534
    %v539 = vxor.u32 %v531, %v535
    %v540 = vxor.u32 %v532, %v536
    %v541 = vcvt.s32.f32 %v537
    %v542 = vcvt.s32.f32 %v538
    %v543 = vcvt.s32.f32 %v539
    %v544 = vcvt.s32.f32 %v540
    %v545 = vmul.f32 %v541, 2.3283064e-10
    %v546 = vmul.f32 %v542, 2.3283064e-10
    %v547 = vmul.f32 %v543, 2.3283064e-10
    %v548 = vmul.f32 %v544, 2.3283064e-10
    %v549 = vadd.f32 %v545, 0.5
    %v550 = vadd.f32 %v546, 0.5
    %v551 = vadd.f32 %v547, 0.5
    %v552 = vadd.f32 %v548, 0.5
    %v553 = vmul.f32 %v497, %v549
    %v554 = vmul.f32 %v498, %v550
    %v555 = vmul.f32 %v499, %v551
    %v556 = vmul.f32 %v500, %v552
    %vm557 = vcmp.gt.f32.partialorder %v553, %v118
    %vm558 = vcmp.gt.f32.partialorder %v554, %v120
    %vm559 = vcmp.gt.f32.partialorder %v555, %v122
    %vm560 = vcmp.gt.f32.partialorder %v556, %v124
    %v561 = vsel %vm557, 1.0, 0.0
    %v562 = vsel %vm558, 1.0, 0.0
    %v563 = vsel %vm559, 1.0, 0.0
    %v564 = vsel %vm560, 1.0, 0.0
    %v565 = vadd.f32 %v509, %v561
    %v566 = vadd.f32 %v510, %v562
    %v567 = vadd.f32 %v511, %v563
    %v568 = vadd.f32 %v512, %v564
    %v569 = vshll.u32 %v537, 13
    %v570 = vshll.u32 %v538, 13
    %v571 = vshll.u32 %v539, 13
    %v572 = vshll.u32 %v540, 13
    %v573 = vxor.u32 %v537, %v569
    %v574 = vxor.u32 %v538, %v570
    %v575 = vxor.u32 %v539, %v571
    %v576 = vxor.u32 %v540, %v572
    %v577 = vshra.s32 %v573, 17
    %v578 = vshra.s32 %v574, 17
    %v579 = vshra.s32 %v575, 17
    %v580 = vshra.s32 %v576, 17
    %v581 = vand.u32 %v577, 32767
    %v582 = vand.u32 %v578, 32767
    %v583 = vand.u32 %v579, 32767
    %v584 = vand.u32 %v580, 32767
    %v585 = vxor.u32 %v573, %v581
    %v586 = vxor.u32 %v574, %v582
    %v587 = vxor.u32 %v575, %v583
    %v588 = vxor.u32 %v576, %v584
    %v589 = vshll.u32 %v585, 5
    %v590 = vshll.u32 %v586, 5
    %v591 = vshll.u32 %v587, 5
    %v592 = vshll.u32 %v588, 5
    %v593 = vxor.u32 %v585, %v589
    %v594 = vxor.u32 %v586, %v590
    %v595 = vxor.u32 %v587, %v591
    %v596 = vxor.u32 %v588, %v592
    %v597 = vcvt.s32.f32 %v593
    %v598 = vcvt.s32.f32 %v594
    %v599 = vcvt.s32.f32 %v595
    %v600 = vcvt.s32.f32 %v596
    %v601 = vmul.f32 %v597, 2.3283064e-10
    %v602 = vmul.f32 %v598, 2.3283064e-10
    %v603 = vmul.f32 %v599, 2.3283064e-10
    %v604 = vmul.f32 %v600, 2.3283064e-10
    %v605 = vadd.f32 %v601, 0.5
    %v606 = vadd.f32 %v602, 0.5
    %v607 = vadd.f32 %v603, 0.5
    %v608 = vadd.f32 %v604, 0.5
    %v609 = vmul.f32 %v553, %v605
    %v610 = vmul.f32 %v554, %v606
    %v611 = vmul.f32 %v555, %v607
    %v612 = vmul.f32 %v556, %v608
    %vm613 = vcmp.gt.f32.partialorder %v609, %v118
    %vm614 = vcmp.gt.f32.partialorder %v610, %v120
    %vm615 = vcmp.gt.f32.partialorder %v611, %v122
    %vm616 = vcmp.gt.f32.partialorder %v612, %v124
    %v617 = vsel %vm613, 1.0, 0.0
    %v618 = vsel %vm614, 1.0, 0.0
    %v619 = vsel %vm615, 1.0, 0.0
    %v620 = vsel %vm616, 1.0, 0.0
    %v621 = vadd.f32 %v565, %v617
    %v622 = vadd.f32 %v566, %v618
    %v623 = vadd.f32 %v567, %v619
    %v624 = vadd.f32 %v568, %v620
    %v625 = vshll.u32 %v593, 13
    %v626 = vshll.u32 %v594, 13
    %v627 = vshll.u32 %v595, 13
    %v628 = vshll.u32 %v596, 13
    %v629 = vxor.u32 %v593, %v625
    %v630 = vxor.u32 %v594, %v626
    %v631 = vxor.u32 %v595, %v627
    %v632 = vxor.u32 %v596, %v628
    %v633 = vshra.s32 %v629, 17
    %v634 = vshra.s32 %v630, 17
    %v635 = vshra.s32 %v631, 17
    %v636 = vshra.s32 %v632, 17
    %v637 = vand.u32 %v633, 32767
    %v638 = vand.u32 %v634, 32767
    %v639 = vand.u32 %v635, 32767
    %v640 = vand.u32 %v636, 32767
    %v641 = vxor.u32 %v629, %v637
    %v642 = vxor.u32 %v630, %v638
    %v643 = vxor.u32 %v631, %v639
    %v644 = vxor.u32 %v632, %v640
    %v645 = vshll.u32 %v641, 5
    %v646 = vshll.u32 %v642, 5
    %v647 = vshll.u32 %v643, 5
    %v648 = vshll.u32 %v644, 5
    %v649 = vxor.u32 %v641, %v645
    %v650 = vxor.u32 %v642, %v646
    %v651 = vxor.u32 %v643, %v647
    %v652 = vxor.u32 %v644, %v648
    %v653 = vcvt.s32.f32 %v649
    %v654 = vcvt.s32.f32 %v650
    %v655 = vcvt.s32.f32 %v651
    %v656 = vcvt.s32.f32 %v652
    %v657 = vmul.f32 %v653, 2.3283064e-10
    %v658 = vmul.f32 %v654, 2.3283064e-10
    %v659 = vmul.f32 %v655, 2.3283064e-10
    %v660 = vmul.f32 %v656, 2.3283064e-10
    %v661 = vadd.f32 %v657, 0.5
    %v662 = vadd.f32 %v658, 0.5
    %v663 = vadd.f32 %v659, 0.5
    %v664 = vadd.f32 %v660, 0.5
    %v665 = vmul.f32 %v609, %v661
    %v666 = vmul.f32 %v610, %v662
    %v667 = vmul.f32 %v611, %v663
    %v668 = vmul.f32 %v612, %v664
    %vm669 = vcmp.gt.f32.partialorder %v665, %v118
    %vm670 = vcmp.gt.f32.partialorder %v666, %v120
    %vm671 = vcmp.gt.f32.partialorder %v667, %v122
    %vm672 = vcmp.gt.f32.partialorder %v668, %v124
    %v673 = vsel %vm669, 1.0, 0.0
    %v674 = vsel %vm670, 1.0, 0.0
    %v675 = vsel %vm671, 1.0, 0.0
    %v676 = vsel %vm672, 1.0, 0.0
    %v677 = vadd.f32 %v621, %v673
    %v678 = vadd.f32 %v622, %v674
    %v679 = vadd.f32 %v623, %v675
    %v680 = vadd.f32 %v624, %v676
    %v681 = vshll.u32 %v649, 13
    %v682 = vshll.u32 %v650, 13
    %v683 = vshll.u32 %v651, 13
    %v684 = vshll.u32 %v652, 13
    %v685 = vxor.u32 %v649, %v681
    %v686 = vxor.u32 %v650, %v682
    %v687 = vxor.u32 %v651, %v683
    %v688 = vxor.u32 %v652, %v684
    %v689 = vshra.s32 %v685, 17
    %v690 = vshra.s32 %v686, 17
    %v691 = vshra.s32 %v687, 17
    %v692 = vshra.s32 %v688, 17
    %v693 = vand.u32 %v689, 32767
    %v694 = vand.u32 %v690, 32767
    %v695 = vand.u32 %v691, 32767
    %v696 = vand.u32 %v692, 32767
    %v697 = vxor.u32 %v685, %v693
    %v698 = vxor.u32 %v686, %v694
    %v699 = vxor.u32 %v687, %v695
    %v700 = vxor.u32 %v688, %v696
    %v701 = vshll.u32 %v697, 5
    %v702 = vshll.u32 %v698, 5
    %v703 = vshll.u32 %v699, 5
    %v704 = vshll.u32 %v700, 5
    %v705 = vxor.u32 %v697, %v701
    %v706 = vxor.u32 %v698, %v702
    %v707 = vxor.u32 %v699, %v703
    %v708 = vxor.u32 %v700, %v704
    %v709 = vcvt.s32.f32 %v705
    %v710 = vcvt.s32.f32 %v706
    %v711 = vcvt.s32.f32 %v707
    %v712 = vcvt.s32.f32 %v708
    %v713 = vmul.f32 %v709, 2.3283064e-10
    %v714 = vmul.f32 %v710, 2.3283064e-10
    %v715 = vmul.f32 %v711, 2.3283064e-10
    %v716 = vmul.f32 %v712, 2.3283064e-10
    %v717 = vadd.f32 %v713, 0.5
    %v718 = vadd.f32 %v714, 0.5
    %v719 = vadd.f32 %v715, 0.5
    %v720 = vadd.f32 %v716, 0.5
    %v721 = vmul.f32 %v665, %v717
    %v722 = vmul.f32 %v666, %v718
    %v723 = vmul.f32 %v667, %v719
    %v724 = vmul.f32 %v668, %v720
    %vm725 = vcmp.gt.f32.partialorder %v721, %v118
    %vm726 = vcmp.gt.f32.partialorder %v722, %v120
    %vm727 = vcmp.gt.f32.partialorder %v723, %v122
    %vm728 = vcmp.gt.f32.partialorder %v724, %v124
    %v729 = vsel %vm725, 1.0, 0.0
    %v730 = vsel %vm726, 1.0, 0.0
    %v731 = vsel %vm727, 1.0, 0.0
    %v732 = vsel %vm728, 1.0, 0.0
    %v733 = vadd.f32 %v677, %v729
    %v734 = vadd.f32 %v678, %v730
    %v735 = vadd.f32 %v679, %v731
    %v736 = vadd.f32 %v680, %v732
    %v737 = vshll.u32 %v705, 13
    %v738 = vshll.u32 %v706, 13
    %v739 = vshll.u32 %v707, 13
    %v740 = vshll.u32 %v708, 13
    %v741 = vxor.u32 %v705, %v737
    %v742 = vxor.u32 %v706, %v738
    %v743 = vxor.u32 %v707, %v739
    %v744 = vxor.u32 %v708, %v740
    %v745 = vshra.s32 %v741, 17
    %v746 = vshra.s32 %v742, 17
    %v747 = vshra.s32 %v743, 17
    %v748 = vshra.s32 %v744, 17
    %v749 = vand.u32 %v745, 32767
    %v750 = vand.u32 %v746, 32767
    %v751 = vand.u32 %v747, 32767
    %v752 = vand.u32 %v748, 32767
    %v753 = vxor.u32 %v741, %v749
    %v754 = vxor.u32 %v742, %v750
    %v755 = vxor.u32 %v743, %v751
    %v756 = vxor.u32 %v744, %v752
    %v757 = vshll.u32 %v753, 5
    %v758 = vshll.u32 %v754, 5
    %v759 = vshll.u32 %v755, 5
    %v760 = vshll.u32 %v756, 5
    %v761 = vxor.u32 %v753, %v757
    %v762 = vxor.u32 %v754, %v758
    %v763 = vxor.u32 %v755, %v759
    %v764 = vxor.u32 %v756, %v760
    %v765 = vcvt.s32.f32 %v761
    %v766 = vcvt.s32.f32 %v762
    %v767 = vcvt.s32.f32 %v763
    %v768 = vcvt.s32.f32 %v764
    %v769 = vmul.f32 %v765, 2.3283064e-10
    %v770 = vmul.f32 %v766, 2.3283064e-10
    %v771 = vmul.f32 %v767, 2.3283064e-10
    %v772 = vmul.f32 %v768, 2.3283064e-10
    %v773 = vadd.f32 %v769, 0.5
    %v774 = vadd.f32 %v770, 0.5
    %v775 = vadd.f32 %v771, 0.5
    %v776 = vadd.f32 %v772, 0.5
    %v777 = vmul.f32 %v721, %v773
    %v778 = vmul.f32 %v722, %v774
    %v779 = vmul.f32 %v723, %v775
    %v780 = vmul.f32 %v724, %v776
    %vm781 = vcmp.gt.f32.partialorder %v777, %v118
    %vm782 = vcmp.gt.f32.partialorder %v778, %v120
    %vm783 = vcmp.gt.f32.partialorder %v779, %v122
    %vm784 = vcmp.gt.f32.partialorder %v780, %v124
    %v785 = vsel %vm781, 1.0, 0.0
    %v786 = vsel %vm782, 1.0, 0.0
    %v787 = vsel %vm783, 1.0, 0.0
    %v788 = vsel %vm784, 1.0, 0.0
    %v789 = vadd.f32 %v733, %v785
    %v790 = vadd.f32 %v734, %v786
    %v791 = vadd.f32 %v735, %v787
    %v792 = vadd.f32 %v736, %v788
    %v793 = vshll.u32 %v761, 13
    %v794 = vshll.u32 %v762, 13
    %v795 = vshll.u32 %v763, 13
    %v796 = vshll.u32 %v764, 13
    %v797 = vxor.u32 %v761, %v793
    %v798 = vxor.u32 %v762, %v794
    %v799 = vxor.u32 %v763, %v795
    %v800 = vxor.u32 %v764, %v796
    %v801 = vshra.s32 %v797, 17
    %v802 = vshra.s32 %v798, 17
    %v803 = vshra.s32 %v799, 17
    %v804 = vshra.s32 %v800, 17
    %v805 = vand.u32 %v801, 32767
    %v806 = vand.u32 %v802, 32767
    %v807 = vand.u32 %v803, 32767
    %v808 = vand.u32 %v804, 32767
    %v809 = vxor.u32 %v797, %v805
    %v810 = vxor.u32 %v798, %v806
    %v811 = vxor.u32 %v799, %v807
    %v812 = vxor.u32 %v800, %v808
    %v813 = vshll.u32 %v809, 5
    %v814 = vshll.u32 %v810, 5
    %v815 = vshll.u32 %v811, 5
    %v816 = vshll.u32 %v812, 5
    %v817 = vxor.u32 %v809, %v813
    %v818 = vxor.u32 %v810, %v814
    %v819 = vxor.u32 %v811, %v815
    %v820 = vxor.u32 %v812, %v816
    %v821 = vcvt.s32.f32 %v817
    %v822 = vcvt.s32.f32 %v818
    %v823 = vcvt.s32.f32 %v819
    %v824 = vcvt.s32.f32 %v820
    %v825 = vmul.f32 %v821, 2.3283064e-10
    %v826 = vmul.f32 %v822, 2.3283064e-10
    %v827 = vmul.f32 %v823, 2.3283064e-10
    %v828 = vmul.f32 %v824, 2.3283064e-10
    %v829 = vadd.f32 %v825, 0.5
    %v830 = vadd.f32 %v826, 0.5
    %v831 = vadd.f32 %v827, 0.5
    %v832 = vadd.f32 %v828, 0.5
    %v833 = vmul.f32 %v777, %v829
    %v834 = vmul.f32 %v778, %v830
    %v835 = vmul.f32 %v779, %v831
    %v836 = vmul.f32 %v780, %v832
    %vm837 = vcmp.gt.f32.partialorder %v833, %v118
    %vm838 = vcmp.gt.f32.partialorder %v834, %v120
    %vm839 = vcmp.gt.f32.partialorder %v835, %v122
    %vm840 = vcmp.gt.f32.partialorder %v836, %v124
    %v841 = vsel %vm837, 1.0, 0.0
    %v842 = vsel %vm838, 1.0, 0.0
    %v843 = vsel %vm839, 1.0, 0.0
    %v844 = vsel %vm840, 1.0, 0.0
    %v845 = vadd.f32 %v789, %v841
    %v846 = vadd.f32 %v790, %v842
    %v847 = vadd.f32 %v791, %v843
    %v848 = vadd.f32 %v792, %v844
    %v849 = vshll.u32 %v817, 13
    %v850 = vshll.u32 %v818, 13
    %v851 = vshll.u32 %v819, 13
    %v852 = vshll.u32 %v820, 13
    %v853 = vxor.u32 %v817, %v849
    %v854 = vxor.u32 %v818, %v850
    %v855 = vxor.u32 %v819, %v851
    %v856 = vxor.u32 %v820, %v852
    %v857 = vshra.s32 %v853, 17
    %v858 = vshra.s32 %v854, 17
    %v859 = vshra.s32 %v855, 17
    %v860 = vshra.s32 %v856, 17
    %v861 = vand.u32 %v857, 32767
    %v862 = vand.u32 %v858, 32767
    %v863 = vand.u32 %v859, 32767
    %v864 = vand.u32 %v860, 32767
    %v865 = vxor.u32 %v853, %v861
    %v866 = vxor.u32 %v854, %v862
    %v867 = vxor.u32 %v855, %v863
    %v868 = vxor.u32 %v856, %v864
    %v869 = vshll.u32 %v865, 5
    %v870 = vshll.u32 %v866, 5
    %v871 = vshll.u32 %v867, 5
    %v872 = vshll.u32 %v868, 5
    %v873 = vxor.u32 %v865, %v869
    %v874 = vxor.u32 %v866, %v870
    %v875 = vxor.u32 %v867, %v871
    %v876 = vxor.u32 %v868, %v872
    %v877 = vcvt.s32.f32 %v873
    %v878 = vcvt.s32.f32 %v874
    %v879 = vcvt.s32.f32 %v875
    %v880 = vcvt.s32.f32 %v876
    %v881 = vmul.f32 %v877, 2.3283064e-10
    %v882 = vmul.f32 %v878, 2.3283064e-10
    %v883 = vmul.f32 %v879, 2.3283064e-10
    %v884 = vmul.f32 %v880, 2.3283064e-10
    %v885 = vadd.f32 %v881, 0.5
    %v886 = vadd.f32 %v882, 0.5
    %v887 = vadd.f32 %v883, 0.5
    %v888 = vadd.f32 %v884, 0.5
    %v889 = vmul.f32 %v833, %v885
    %v890 = vmul.f32 %v834, %v886
    %v891 = vmul.f32 %v835, %v887
    %v892 = vmul.f32 %v836, %v888
    %vm893 = vcmp.gt.f32.partialorder %v889, %v118
    %vm894 = vcmp.gt.f32.partialorder %v890, %v120
    %vm895 = vcmp.gt.f32.partialorder %v891, %v122
    %vm896 = vcmp.gt.f32.partialorder %v892, %v124
    %v897 = vsel %vm893, 1.0, 0.0
    %v898 = vsel %vm894, 1.0, 0.0
    %v899 = vsel %vm895, 1.0, 0.0
    %v900 = vsel %vm896, 1.0, 0.0
    %v901 = vadd.f32 %v845, %v897
    %v902 = vadd.f32 %v846, %v898
    %v903 = vadd.f32 %v847, %v899
    %v904 = vadd.f32 %v848, %v900
    %v905 = vshll.u32 %v873, 13
    %v906 = vshll.u32 %v874, 13
    %v907 = vshll.u32 %v875, 13
    %v908 = vshll.u32 %v876, 13
    %v909 = vxor.u32 %v873, %v905
    %v910 = vxor.u32 %v874, %v906
    %v911 = vxor.u32 %v875, %v907
    %v912 = vxor.u32 %v876, %v908
    %v913 = vshra.s32 %v909, 17
    %v914 = vshra.s32 %v910, 17
    %v915 = vshra.s32 %v911, 17
    %v916 = vshra.s32 %v912, 17
    %v917 = vand.u32 %v913, 32767
    %v918 = vand.u32 %v914, 32767
    %v919 = vand.u32 %v915, 32767
    %v920 = vand.u32 %v916, 32767
    %v921 = vxor.u32 %v909, %v917
    %v922 = vxor.u32 %v910, %v918
    %v923 = vxor.u32 %v911, %v919
    %v924 = vxor.u32 %v912, %v920
    %v925 = vshll.u32 %v921, 5
    %v926 = vshll.u32 %v922, 5
    %v927 = vshll.u32 %v923, 5
    %v928 = vshll.u32 %v924, 5
    %v929 = vxor.u32 %v921, %v925
    %v930 = vxor.u32 %v922, %v926
    %v931 = vxor.u32 %v923, %v927
    %v932 = vxor.u32 %v924, %v928
    %v933 = vcvt.s32.f32 %v929
    %v934 = vcvt.s32.f32 %v930
    %v935 = vcvt.s32.f32 %v931
    %v936 = vcvt.s32.f32 %v932
    %v937 = vmul.f32 %v933, 2.3283064e-10
    %v938 = vmul.f32 %v934, 2.3283064e-10
    %v939 = vmul.f32 %v935, 2.3283064e-10
    %v940 = vmul.f32 %v936, 2.3283064e-10
    %v941 = vadd.f32 %v937, 0.5
    %v942 = vadd.f32 %v938, 0.5
    %v943 = vadd.f32 %v939, 0.5
    %v944 = vadd.f32 %v940, 0.5
    %v945 = vmul.f32 %v889, %v941
    %v946 = vmul.f32 %v890, %v942
    %v947 = vmul.f32 %v891, %v943
    %v948 = vmul.f32 %v892, %v944
    %vm949 = vcmp.gt.f32.partialorder %v945, %v118
    %vm950 = vcmp.gt.f32.partialorder %v946, %v120
    %vm951 = vcmp.gt.f32.partialorder %v947, %v122
    %vm952 = vcmp.gt.f32.partialorder %v948, %v124
    %v953 = vsel %vm949, 1.0, 0.0
    %v954 = vsel %vm950, 1.0, 0.0
    %v955 = vsel %vm951, 1.0, 0.0
    %v956 = vsel %vm952, 1.0, 0.0
    %v957 = vadd.f32 %v901, %v953
    %v958 = vadd.f32 %v902, %v954
    %v959 = vadd.f32 %v903, %v955
    %v960 = vadd.f32 %v904, %v956
    %v961 = vshll.u32 %v929, 13
    %v962 = vshll.u32 %v930, 13
    %v963 = vshll.u32 %v931, 13
    %v964 = vshll.u32 %v932, 13
    %v965 = vxor.u32 %v929, %v961
    %v966 = vxor.u32 %v930, %v962
    %v967 = vxor.u32 %v931, %v963
    %v968 = vxor.u32 %v932, %v964
    %v969 = vshra.s32 %v965, 17
    %v970 = vshra.s32 %v966, 17
    %v971 = vshra.s32 %v967, 17
    %v972 = vshra.s32 %v968, 17
    %v973 = vand.u32 %v969, 32767
    %v974 = vand.u32 %v970, 32767
    %v975 = vand.u32 %v971, 32767
    %v976 = vand.u32 %v972, 32767
    %v977 = vxor.u32 %v965, %v973
    %v978 = vxor.u32 %v966, %v974
    %v979 = vxor.u32 %v967, %v975
    %v980 = vxor.u32 %v968, %v976
    %v981 = vshll.u32 %v977, 5
    %v982 = vshll.u32 %v978, 5
    %v983 = vshll.u32 %v979, 5
    %v984 = vshll.u32 %v980, 5
    %v985 = vxor.u32 %v977, %v981
    %v986 = vxor.u32 %v978, %v982
    %v987 = vxor.u32 %v979, %v983
    %v988 = vxor.u32 %v980, %v984
    %v989 = vcvt.s32.f32 %v985
    %v990 = vcvt.s32.f32 %v986
    %v991 = vcvt.s32.f32 %v987
    %v992 = vcvt.s32.f32 %v988
    %v993 = vmul.f32 %v989, 2.3283064e-10
    %v994 = vmul.f32 %v990, 2.3283064e-10
    %v995 = vmul.f32 %v991, 2.3283064e-10
    %v996 = vmul.f32 %v992, 2.3283064e-10
    %v997 = vadd.f32 %v993, 0.5
    %v998 = vadd.f32 %v994, 0.5
    %v999 = vadd.f32 %v995, 0.5
    %v1000 = vadd.f32 %v996, 0.5
    %v1001 = vmul.f32 %v945, %v997
    %v1002 = vmul.f32 %v946, %v998
    %v1003 = vmul.f32 %v947, %v999
    %v1004 = vmul.f32 %v948, %v1000
    %vm1005 = vcmp.gt.f32.partialorder %v1001, %v118
    %vm1006 = vcmp.gt.f32.partialorder %v1002, %v120
    %vm1007 = vcmp.gt.f32.partialorder %v1003, %v122
    %vm1008 = vcmp.gt.f32.partialorder %v1004, %v124
    %v1009 = vsel %vm1005, 1.0, 0.0
    %v1010 = vsel %vm1006, 1.0, 0.0
    %v1011 = vsel %vm1007, 1.0, 0.0
    %v1012 = vsel %vm1008, 1.0, 0.0
    %v1013 = vadd.f32 %v957, %v1009
    %v1014 = vadd.f32 %v958, %v1010
    %v1015 = vadd.f32 %v959, %v1011
    %v1016 = vadd.f32 %v960, %v1012
    %v1017 = vshll.u32 %v985, 13
    %v1018 = vshll.u32 %v986, 13
    %v1019 = vshll.u32 %v987, 13
    %v1020 = vshll.u32 %v988, 13
    %v1021 = vxor.u32 %v985, %v1017
    %v1022 = vxor.u32 %v986, %v1018
    %v1023 = vxor.u32 %v987, %v1019
    %v1024 = vxor.u32 %v988, %v1020
    %v1025 = vshra.s32 %v1021, 17
    %v1026 = vshra.s32 %v1022, 17
    %v1027 = vshra.s32 %v1023, 17
    %v1028 = vshra.s32 %v1024, 17
    %v1029 = vand.u32 %v1025, 32767
    %v1030 = vand.u32 %v1026, 32767
    %v1031 = vand.u32 %v1027, 32767
    %v1032 = vand.u32 %v1028, 32767
    %v1033 = vxor.u32 %v1021, %v1029
    %v1034 = vxor.u32 %v1022, %v1030
    %v1035 = vxor.u32 %v1023, %v1031
    %v1036 = vxor.u32 %v1024, %v1032
    %v1037 = vshll.u32 %v1033, 5
    %v1038 = vshll.u32 %v1034, 5
    %v1039 = vshll.u32 %v1035, 5
    %v1040 = vshll.u32 %v1036, 5
    %v1041 = vxor.u32 %v1033, %v1037
    %v1042 = vxor.u32 %v1034, %v1038
    %v1043 = vxor.u32 %v1035, %v1039
    %v1044 = vxor.u32 %v1036, %v1040
    %v1045 = vcvt.s32.f32 %v1041
    %v1046 = vcvt.s32.f32 %v1042
    %v1047 = vcvt.s32.f32 %v1043
    %v1048 = vcvt.s32.f32 %v1044
    %v1049 = vmul.f32 %v1045, 2.3283064e-10
    %v1050 = vmul.f32 %v1046, 2.3283064e-10
    %v1051 = vmul.f32 %v1047, 2.3283064e-10
    %v1052 = vmul.f32 %v1048, 2.3283064e-10
    %v1053 = vadd.f32 %v1049, 0.5
    %v1054 = vadd.f32 %v1050, 0.5
    %v1055 = vadd.f32 %v1051, 0.5
    %v1056 = vadd.f32 %v1052, 0.5
    %v1057 = vmul.f32 %v1001, %v1053
    %v1058 = vmul.f32 %v1002, %v1054
    %v1059 = vmul.f32 %v1003, %v1055
    %v1060 = vmul.f32 %v1004, %v1056
    %vm1061 = vcmp.gt.f32.partialorder %v1057, %v118
    %vm1062 = vcmp.gt.f32.partialorder %v1058, %v120
    %vm1063 = vcmp.gt.f32.partialorder %v1059, %v122
    %vm1064 = vcmp.gt.f32.partialorder %v1060, %v124
    %v1065 = vsel %vm1061, 1.0, 0.0
    %v1066 = vsel %vm1062, 1.0, 0.0
    %v1067 = vsel %vm1063, 1.0, 0.0
    %v1068 = vsel %vm1064, 1.0, 0.0
    %v1069 = vadd.f32 %v1013, %v1065
    %v1070 = vadd.f32 %v1014, %v1066
    %v1071 = vadd.f32 %v1015, %v1067
    %v1072 = vadd.f32 %v1016, %v1068
    %v1073 = vshll.u32 %v1041, 13
    %v1074 = vshll.u32 %v1042, 13
    %v1075 = vshll.u32 %v1043, 13
    %v1076 = vshll.u32 %v1044, 13
    %v1077 = vxor.u32 %v1041, %v1073
    %v1078 = vxor.u32 %v1042, %v1074
    %v1079 = vxor.u32 %v1043, %v1075
    %v1080 = vxor.u32 %v1044, %v1076
    %v1081 = vshra.s32 %v1077, 17
    %v1082 = vshra.s32 %v1078, 17
    %v1083 = vshra.s32 %v1079, 17
    %v1084 = vshra.s32 %v1080, 17
    %v1085 = vand.u32 %v1081, 32767
    %v1086 = vand.u32 %v1082, 32767
    %v1087 = vand.u32 %v1083, 32767
    %v1088 = vand.u32 %v1084, 32767
    %v1089 = vxor.u32 %v1077, %v1085
    %v1090 = vxor.u32 %v1078, %v1086
    %v1091 = vxor.u32 %v1079, %v1087
    %v1092 = vxor.u32 %v1080, %v1088
    %v1093 = vshll.u32 %v1089, 5
    %v1094 = vshll.u32 %v1090, 5
    %v1095 = vshll.u32 %v1091, 5
    %v1096 = vshll.u32 %v1092, 5
    %v1097 = vxor.u32 %v1089, %v1093
    %v1098 = vxor.u32 %v1090, %v1094
    %v1099 = vxor.u32 %v1091, %v1095
    %v1100 = vxor.u32 %v1092, %v1096
    %v1101 = vcvt.s32.f32 %v1097
    %v1102 = vcvt.s32.f32 %v1098
    %v1103 = vcvt.s32.f32 %v1099
    %v1104 = vcvt.s32.f32 %v1100
    %v1105 = vmul.f32 %v1101, 2.3283064e-10
    %v1106 = vmul.f32 %v1102, 2.3283064e-10
    %v1107 = vmul.f32 %v1103, 2.3283064e-10
    %v1108 = vmul.f32 %v1104, 2.3283064e-10
    %v1109 = vadd.f32 %v1105, 0.5
    %v1110 = vadd.f32 %v1106, 0.5
    %v1111 = vadd.f32 %v1107, 0.5
    %v1112 = vadd.f32 %v1108, 0.5
    %v1113 = vmul.f32 %v1057, %v1109
    %v1114 = vmul.f32 %v1058, %v1110
    %v1115 = vmul.f32 %v1059, %v1111
    %v1116 = vmul.f32 %v1060, %v1112
    %vm1117 = vcmp.gt.f32.partialorder %v1113, %v118
    %vm1118 = vcmp.gt.f32.partialorder %v1114, %v120
    %vm1119 = vcmp.gt.f32.partialorder %v1115, %v122
    %vm1120 = vcmp.gt.f32.partialorder %v1116, %v124
    %v1121 = vsel %vm1117, 1.0, 0.0
    %v1122 = vsel %vm1118, 1.0, 0.0
    %v1123 = vsel %vm1119, 1.0, 0.0
    %v1124 = vsel %vm1120, 1.0, 0.0
    %v1125 = vadd.f32 %v1069, %v1121
    %v1126 = vadd.f32 %v1070, %v1122
    %v1127 = vadd.f32 %v1071, %v1123
    %v1128 = vadd.f32 %v1072, %v1124
    %v1129 = vld [vmem:[#allocation3] sm:$0xff]
    %v1130 = vld [vmem:[#allocation3 + $0x8] sm:$0xff]
    %v1131 = vld [vmem:[#allocation3 + $0x10] sm:$0xff]
    %v1132 = vld [vmem:[#allocation3 + $0x18] sm:$0xff]
    %v1133 = vadd.f32 %v1129, %v1125
    %v1134 = vadd.f32 %v1130, %v1126
    %v1135 = vadd.f32 %v1131, %v1127
    %v1136 = vadd.f32 %v1132, %v1128
    %1137 = vst [vmem:[#allocation8] sm:$0xff] %v1133
    %1138 = vst [vmem:[#allocation8 + $0x8] sm:$0xff] %v1134
    %1139 = vst [vmem:[#allocation8 + $0x10] sm:$0xff] %v1135
    %1140 = vst [vmem:[#allocation8 + $0x18] sm:$0xff] %v1136
    // Predicated region
    $region22: #{tpu_custom_call.1} parent=1 // pred_check
      _
    $region23: #{tpu_custom_call.1} parent=1 // pred_check_branch
      %1142 = sbr.rel (0) target = $region25
    $region24: #{tpu_custom_call.1} parent=1 // pred_region
      %s1144 = ssub.s32 512, 512
      %1145 = vsyncadd [#allocation5], %s1144
      %s1147 = sshll.u32 [#allocation8], 4
      %s1148 = int_to_ptr.vmem [resolvable:$true] %s1147
      %1150 = dma.vmem_to_hbm [thread:$0]  %s1148, 512, %s3, [#allocation5]
    $region25: #{tpu_custom_call.1} parent=1 // pred_fallthru
      _
    // Predicated region
    $region26: #{tpu_custom_call.1} parent=1 // pred_check
      _
    $region27: #{tpu_custom_call.1} parent=1 // pred_check_branch
      %1152 = sbr.rel (0) target = $region29
    $region28: #{tpu_custom_call.1} parent=1 // pred_region
      %1153 = dma.done [#allocation5], 512
    $region29: #{tpu_custom_call.1} parent=1 // pred_fallthru
      _
    %1154 = vsyncpa [#allocation4], 1
    %1155 = vsyncpa [#allocation7], 1
    %1156 = vsyncpa [#allocation5], 1

</llo_original>
